<compile_context>
chip_gen: v7x
topology: tpu7x:2x2x1
jax: 0.10.0
libtpu: 0.0.40
codegen_flags: <defaults>
</compile_context>

<pallas_src>
import functools

import jax
import jax.numpy as jnp
from jax import lax
from jax.experimental import pallas as pl
from jax.experimental.pallas import tpu as pltpu

_LANE = 128
_SUBLANE = 8


def _round_up(x, m):
    return (x + m - 1) // m * m


def _pad_gate_cols(w, H, Hp):
    """Pad the trailing 4H gate axis (PyTorch order i,f,g,o) to 4Hp per gate."""
    lead = w.shape[:-1]
    w4 = w.reshape(lead + (4, H))
    w4 = jnp.pad(w4, [(0, 0)] * len(lead) + [(0, 0), (0, Hp - H)])
    return w4.reshape(lead + (4 * Hp,))


# ----------------------------- Pallas kernel --------------------------------

def _lstm_chunk_kernel(len_ref, emb_ref, wih_ref, whh_ref,
                       out_ref, hn_ref, cn_ref, gx_ref):
    """One grid step == Tc timesteps of the masked LSTM for one batch block.

    len_ref : (Bb, Hp)      int32 lengths broadcast across lanes (resident)
    emb_ref : (Tc*Bb, Ep)   embedding rows for this time chunk (ones col folded)
    wih_ref : (Ep, 4Hp)     [W_ih^T ; b_ih+b_hh ; 0] resident, mxu dtype
    whh_ref : (Hp, 4Hp)     W_hh^T resident, mxu dtype
    out_ref : (Tc, Bb, Hp)  outputs[t0:t0+Tc]                 (f32)
    hn_ref  : (1, Bb, Hp)   final hidden -- resident carry across time chunks
    cn_ref  : (1, Bb, Hp)   final cell   -- resident carry across time chunks
    gx_ref  : (Tc*Bb, 4Hp)  f32 scratch: x_t @ W_ih^T + b for this chunk
    """
    Tc, Bb, Hp = out_ref.shape
    chunk = pl.program_id(1)          # time axis (axis 1, "arbitrary")

    @pl.when(chunk == 0)
    def _init():
        hn_ref[...] = jnp.zeros_like(hn_ref)
        cn_ref[...] = jnp.zeros_like(cn_ref)

    # Fused input projection: one big matmul per chunk (M = Tc*Bb fills the MXU,
    # unlike the per-step M = Bb recurrent matmul).  Bias arrives via the ones
    # column folded into emb / the bias row in W_ih^T.
    gx_ref[...] = jnp.dot(emb_ref[...], wih_ref[...],
                          preferred_element_type=jnp.float32)

    whh = whh_ref[...]                # (Hp, 4Hp), resident, loaded once/chunk
    len_b = len_ref[...]              # (Bb, Hp) int32
    t0 = chunk * Tc

    # Recurrent carry stays in vregs across the fori_loop; the refs are only
    # touched once per chunk (load here, store after the loop).
    h0 = hn_ref[0]
    c0 = cn_ref[0]

    def step(t, carry):
        h_prev, c_prev = carry
        r0 = pl.multiple_of(t * Bb, Bb)
        gates = gx_ref[pl.ds(r0, Bb), :] + jnp.dot(
            h_prev.astype(whh.dtype), whh, preferred_element_type=jnp.float32)

        # PyTorch LSTM gate order i, f, g, o; each slice lane-aligned (Hp%128==0).
        # sigmoid(x) == 0.5*tanh(0.5*x) + 0.5  (single EUP op per gate).
        i_g = 0.5 * jnp.tanh(0.5 * gates[:, 0 * Hp:1 * Hp]) + 0.5
        f_g = 0.5 * jnp.tanh(0.5 * gates[:, 1 * Hp:2 * Hp]) + 0.5
        g_g = jnp.tanh(gates[:, 2 * Hp:3 * Hp])
        o_g = 0.5 * jnp.tanh(0.5 * gates[:, 3 * Hp:4 * Hp]) + 0.5

        c_cand = f_g * c_prev + i_g * g_g
        h_cand = o_g * jnp.tanh(c_cand)

        # packed-sequence semantics: padded positions keep previous state,
        # unpacked outputs are zero past the sequence length.
        valid = (t0 + t) < len_b                      # (Bb, Hp) bool
        out_ref[t] = jnp.where(valid, h_cand, 0.0)
        return (jnp.where(valid, h_cand, h_prev),
                jnp.where(valid, c_cand, c_prev))

    h_fin, c_fin = lax.fori_loop(0, Tc, step, (h0, c0), unroll=min(Tc, 8))
    hn_ref[0] = h_fin
    cn_ref[0] = c_fin


def lstm_encoder_pallas(emb, lengths, w_ih, w_hh, b_ih, b_hh, *,
                        time_chunk=32, batch_block=None,
                        mxu_dtype=jnp.bfloat16):
    """Masked single-layer LSTM over time-major activations.

    emb     : (S, B, E) float
    lengths : (B,) int
    w_ih    : (4H, E), w_hh : (4H, H), b_ih/b_hh : (4H,)
    Returns (outputs (S,B,H), h_n (1,B,H), c_n (1,B,H)).
    """
    S, B, E = emb.shape
    H = w_hh.shape[1]
    f32 = jnp.float32

    Hp = _round_up(H, _LANE)          # lane-aligned hidden size
    Bp = _round_up(B, _SUBLANE)       # sublane-aligned batch
    Tc = min(time_chunk, S)           # time chunk per grid step
    Sp = _round_up(S, Tc)
    Gp = 4 * Hp
    Ep = _round_up(E + 1, _LANE)      # +1 ones column folds the bias in

    # Batch blocking: default a single block (best for 1-TC chips, the time
    # recurrence is serial per block).  On v7x pass batch_block=Bp//2 so the
    # 'parallel' axis spans both TensorCores.
    Bb = Bp if batch_block is None else batch_block
    assert Bb % _SUBLANE == 0 and Bp % Bb == 0
    NB = Bp // Bb
    NC = Sp // Tc

    # ---- Weights: gate-column padded (i,f,g,o each to Hp), bias row folded ----
    w_ih_t = _pad_gate_cols(jnp.transpose(w_ih).astype(f32), H, Hp)     # (E, 4Hp)
    bias = _pad_gate_cols((b_ih + b_hh).astype(f32)[None, :], H, Hp)    # (1, 4Hp)
    w_ih_t = jnp.concatenate([w_ih_t, bias], axis=0)                    # (E+1, 4Hp)
    w_ih_t = jnp.pad(w_ih_t, ((0, Ep - (E + 1)), (0, 0))).astype(mxu_dtype)
    w_hh_t = _pad_gate_cols(jnp.transpose(w_hh).astype(f32), H, Hp)     # (H, 4Hp)
    w_hh_t = jnp.pad(w_hh_t, ((0, Hp - H), (0, 0))).astype(mxu_dtype)   # (Hp, 4Hp)
    # NOTE: padded hidden lanes stay exactly zero only because h/c start at zero
    # and every padded W_ih/W_hh/bias row & column above is zero-padded.

    # ---- Activations: pad, append ones column (bias), block by batch, cast ----
    emb_p = jnp.pad(emb.astype(f32), ((0, Sp - S), (0, Bp - B), (0, 0)))
    emb_p = jnp.concatenate([emb_p, jnp.ones((Sp, Bp, 1), f32)], axis=-1)
    emb_p = jnp.pad(emb_p, ((0, 0), (0, 0), (0, Ep - (E + 1))))         # (Sp,Bp,Ep)
    emb_blk = (emb_p.reshape(Sp, NB, Bb, Ep)
               .transpose(1, 0, 2, 3)
               .reshape(NB, Sp * Bb, Ep)
               .astype(mxu_dtype))                                      # (NB,Sp*Bb,Ep)

    # Lengths as a small lane-dense resident block; padded batch rows get
    # length 0 -> never valid -> stay exactly zero.
    len_b = jnp.broadcast_to(
        jnp.pad(lengths.astype(jnp.int32), (0, Bp - B))[:, None], (Bp, Hp))

    grid_spec = pltpu.PrefetchScalarGridSpec(
        num_scalar_prefetch=0,
        grid=(NB, NC),                                  # (batch blocks, time chunks)
        in_specs=[
            pl.BlockSpec((Bb, Hp), lambda b, c: (b, 0)),                 # lengths
            pl.BlockSpec((pl.Squeezed(), Tc * Bb, Ep),
                         lambda b, c: (b, c, 0)),                        # emb chunk
            pl.BlockSpec((Ep, Gp), lambda b, c: (0, 0)),                 # W_ih^T (resident)
            pl.BlockSpec((Hp, Gp), lambda b, c: (0, 0)),                 # W_hh^T (resident)
        ],
        out_specs=[
            pl.BlockSpec((Tc, Bb, Hp), lambda b, c: (c, b, 0)),          # outputs chunk
            pl.BlockSpec((1, Bb, Hp), lambda b, c: (0, b, 0)),           # h_n (resident carry)
            pl.BlockSpec((1, Bb, Hp), lambda b, c: (0, b, 0)),           # c_n (resident carry)
        ],
        scratch_shapes=[pltpu.VMEM((Tc * Bb, Gp), f32)],                 # gx scratch
    )

    # Raise the scoped VMEM limit only when the working set actually needs it.
    msize = jnp.dtype(mxu_dtype).itemsize
    vmem_est = (2 * Tc * Bb * Ep * msize          # emb chunk (double-buffered)
                + 2 * Tc * Bb * Hp * 4            # out chunk (double-buffered)
                + 2 * (Ep + Hp) * Gp * msize      # W_ih^T + W_hh^T
                + 2 * Bb * Hp * 4                 # lengths
                + Tc * Bb * Gp * 4                # gx scratch
                + 4 * Bb * Hp * 4)                # h_n, c_n
    cp_kwargs = dict(dimension_semantics=("parallel", "arbitrary"))
    if vmem_est > (24 << 20):
        cp_kwargs["vmem_limit_bytes"] = int(vmem_est * 5 // 4)

    out_p, h_p, c_p = pl.pallas_call(
        _lstm_chunk_kernel,
        grid_spec=grid_spec,
        out_shape=(
            jax.ShapeDtypeStruct((Sp, Bp, Hp), f32),
            jax.ShapeDtypeStruct((1, Bp, Hp), f32),
            jax.ShapeDtypeStruct((1, Bp, Hp), f32),
        ),
        compiler_params=pltpu.CompilerParams(**cp_kwargs),
    )(len_b, emb_blk, w_ih_t, w_hh_t)

    return out_p[:S, :B, :H], h_p[:, :B, :H], c_p[:, :B, :H]


# ------------------------------ Encoder wrapper ------------------------------

def rnn_encoder_forward(params, input_ids, lengths, *, mxu_dtype=jnp.bfloat16):
    """RNNEncoder.forward semantics.

    input_ids : (S, B, 1) int32 token ids
    lengths   : (B,)      int32 sequence lengths
    Returns ((h_n, c_n), outputs) matching PyTorch's (hidden_t, outputs).
    """
    # Embedding lookup (gather stays in plain JAX).
    emb = jnp.take(params["embedding"], input_ids[:, :, 0], axis=0)   # (S, B, E)
    outputs, h_n, c_n = lstm_encoder_pallas(
        emb, lengths,
        params["w_ih"], params["w_hh"], params["b_ih"], params["b_hh"],
        mxu_dtype=mxu_dtype)
    return (h_n, c_n), outputs


# ---------------------------- Pure-JAX reference -----------------------------

def rnn_encoder_reference(params, input_ids, lengths):
    S, B, _ = input_ids.shape
    H = params["w_hh"].shape[1]
    emb = jnp.take(params["embedding"], input_ids[:, :, 0], axis=0)
    t_idx = jnp.arange(S, dtype=jnp.int32)[:, None]
    mask = (t_idx < lengths[None, :]).astype(jnp.float32)[:, :, None]

    w_ih, w_hh = params["w_ih"], params["w_hh"]
    b = params["b_ih"] + params["b_hh"]

    def step(carry, inp):
        h, c = carry
        x_t, m_t = inp
        gates = x_t @ w_ih.T + h @ w_hh.T + b
        i, f, g, o = jnp.split(gates, 4, axis=-1)
        i, f, g, o = jax.nn.sigmoid(i), jax.nn.sigmoid(f), jnp.tanh(g), jax.nn.sigmoid(o)
        c_cand = f * c + i * g
        h_cand = o * jnp.tanh(c_cand)
        h_new = m_t * h_cand + (1.0 - m_t) * h
        c_new = m_t * c_cand + (1.0 - m_t) * c
        return (h_new, c_new), m_t * h_cand

    init = (jnp.zeros((B, H), jnp.float32), jnp.zeros((B, H), jnp.float32))
    (h_n, c_n), outs = lax.scan(step, init, (emb, mask))
    return (h_n[None], c_n[None]), outs


# ----------------------------------- Main ------------------------------------

if __name__ == "__main__":
    # Small shapes consistent with the module's forward
    S, B = 8, 4                 # src_len, batch
    VOCAB, E, H = 20, 32, 32    # vocab, embedding_size, hidden_size (1 layer, unidir)

    key = jax.random.PRNGKey(0)
    k_emb, k_wih, k_whh, k_bih, k_bhh, k_ids = jax.random.split(key, 6)

    scale = 1.0 / jnp.sqrt(jnp.float32(H))
    params = {
        "embedding": jax.random.normal(k_emb, (VOCAB, E), jnp.float32) * 0.1,
        "w_ih": jax.random.uniform(k_wih, (4 * H, E), jnp.float32, -scale, scale),
        "w_hh": jax.random.uniform(k_whh, (4 * H, H), jnp.float32, -scale, scale),
        "b_ih": jax.random.uniform(k_bih, (4 * H,), jnp.float32, -scale, scale),
        "b_hh": jax.random.uniform(k_bhh, (4 * H,), jnp.float32, -scale, scale),
    }

    input_ids = jax.random.randint(k_ids, (S, B, 1), 0, VOCAB, dtype=jnp.int32)
    lengths = jnp.array([8, 5, 3, 7], dtype=jnp.int32)

    # Reference (pure JAX, f32).
    (h_ref, c_ref), outs_ref = rnn_encoder_reference(params, input_ids, lengths)

    # Default fast path: bf16 MXU operands, f32 accumulation / gates.
    fwd_bf16 = jax.jit(functools.partial(rnn_encoder_forward, params))
    (h_n, c_n), outputs = fwd_bf16(input_ids, lengths)
    jax.block_until_ready((h_n, c_n, outputs))

    assert outputs.shape == (S, B, H)
    assert h_n.shape == (1, B, H) and c_n.shape == (1, B, H)
    assert jnp.allclose(outputs, outs_ref, atol=2e-2, rtol=2e-2)
    assert jnp.allclose(h_n, h_ref, atol=2e-2, rtol=2e-2)
    assert jnp.allclose(c_n, c_ref, atol=2e-2, rtol=2e-2)

    # Strict f32 path (same kernel, f32 MXU operands) for tight numerics.
    fwd_f32 = jax.jit(functools.partial(rnn_encoder_forward, params,
                                        mxu_dtype=jnp.float32))
    (h32, c32), out32 = fwd_f32(input_ids, lengths)
    jax.block_until_ready((h32, c32, out32))
    assert jnp.allclose(out32, outs_ref, atol=1e-3, rtol=1e-3)
    assert jnp.allclose(h32, h_ref, atol=1e-3, rtol=1e-3)
    assert jnp.allclose(c32, c_ref, atol=1e-3, rtol=1e-3)

    print("KERNEL_OK")
</pallas_src>

<mosaic_0001>
module attributes {stable_mosaic.version = 11 : i64} {
  func.func @_lstm_chunk_kernel(%arg0: i32, %arg1: i32, %arg2: memref<8x128xi32, #tpu.memory_space<vmem>>, %arg3: memref<1x64x128xbf16, #tpu.memory_space<vmem>>, %arg4: memref<128x512xbf16, #tpu.memory_space<vmem>>, %arg5: memref<128x512xbf16, #tpu.memory_space<vmem>>, %arg6: memref<8x8x128xf32, #tpu.memory_space<vmem>>, %arg7: memref<1x8x128xf32, #tpu.memory_space<vmem>>, %arg8: memref<1x8x128xf32, #tpu.memory_space<vmem>>, %arg9: memref<64x512xf32, #tpu.memory_space<vmem>>) attributes {dimension_semantics = [#tpu.dimension_semantics<parallel>, #tpu.dimension_semantics<arbitrary>], iteration_bounds = array<i64: 1, 1>, scalar_prefetch = 0 : i64, scratch_operands = 1 : i64, tpu.core_type = #tpu.core_type<tc>, window_params = [{transform_indices = @transform_0, window_bounds = array<i64: 8, 128>}, {transform_indices = @transform_1, window_bounds = array<i64: 1, 64, 128>}, {pipeline_mode = #tpu.pipeline_mode<synchronous>, transform_indices = @transform_2, window_bounds = array<i64: 128, 512>}, {pipeline_mode = #tpu.pipeline_mode<synchronous>, transform_indices = @transform_3, window_bounds = array<i64: 128, 512>}, {transform_indices = @transform_4, window_bounds = array<i64: 8, 8, 128>}, {transform_indices = @transform_5, window_bounds = array<i64: 1, 8, 128>}, {transform_indices = @transform_6, window_bounds = array<i64: 1, 8, 128>}]} {
    %c0_i32 = arith.constant 0 : i32
    %0 = arith.cmpi eq, %arg1, %c0_i32 : i32
    %1 = arith.extui %0 : i1 to i32
    %c0_i32_0 = arith.constant 0 : i32
    %2 = arith.cmpi ne, %1, %c0_i32_0 : i32
    scf.if %2 {
      %cst_145 = arith.constant 0.000000e+00 : f32
      %413 = vector.broadcast %cst_145 : f32 to vector<1x8x128xf32>
      %c0_146 = arith.constant 0 : index
      %c0_147 = arith.constant 0 : index
      %c0_148 = arith.constant 0 : index
      %414 = vector.load %arg7[%c0_146, %c0_147, %c0_148] : memref<1x8x128xf32, #tpu.memory_space<vmem>>, vector<1x8x128xf32>
      tpu.vector_store %arg7[%c0_146, %c0_147, %c0_148], %413 {strides = array<i32>} : memref<1x8x128xf32, #tpu.memory_space<vmem>>, vector<1x8x128xf32>,
      %cst_149 = arith.constant 0.000000e+00 : f32
      %415 = vector.broadcast %cst_149 : f32 to vector<1x8x128xf32>
      %c0_150 = arith.constant 0 : index
      %c0_151 = arith.constant 0 : index
      %c0_152 = arith.constant 0 : index
      %416 = vector.load %arg8[%c0_150, %c0_151, %c0_152] : memref<1x8x128xf32, #tpu.memory_space<vmem>>, vector<1x8x128xf32>
      tpu.vector_store %arg8[%c0_150, %c0_151, %c0_152], %415 {strides = array<i32>} : memref<1x8x128xf32, #tpu.memory_space<vmem>>, vector<1x8x128xf32>,
    } else {
    }
    %c0 = arith.constant 0 : index
    %c0_1 = arith.constant 0 : index
    %c0_2 = arith.constant 0 : index
    %3 = vector.load %arg3[%c0, %c0_1, %c0_2] : memref<1x64x128xbf16, #tpu.memory_space<vmem>>, vector<1x64x128xbf16>
    %4 = vector.shape_cast %3 : vector<1x64x128xbf16> to vector<64x128xbf16>
    %c0_3 = arith.constant 0 : index
    %c0_4 = arith.constant 0 : index
    %5 = vector.load %arg4[%c0_3, %c0_4] : memref<128x512xbf16, #tpu.memory_space<vmem>>, vector<128x512xbf16>
    %cst = arith.constant dense<0.000000e+00> : vector<64x512xf32>
    %6 = tpu.matmul %4, %5, %cst {dimension_numbers = #tpu.dot_dimension_numbers<[1], [0], [0], [1], [0, 0, 1, 1], [], []>} : vector<64x128xbf16>, vector<128x512xbf16>, vector<64x512xf32> -> vector<64x512xf32>
    %c0_5 = arith.constant 0 : index
    %c0_6 = arith.constant 0 : index
    %7 = vector.load %arg9[%c0_5, %c0_6] : memref<64x512xf32, #tpu.memory_space<vmem>>, vector<64x512xf32>
    tpu.vector_store %arg9[%c0_5, %c0_6], %6 {strides = array<i32>} : memref<64x512xf32, #tpu.memory_space<vmem>>, vector<64x512xf32>,
    %c0_7 = arith.constant 0 : index
    %c0_8 = arith.constant 0 : index
    %8 = vector.load %arg5[%c0_7, %c0_8] : memref<128x512xbf16, #tpu.memory_space<vmem>>, vector<128x512xbf16>
    %c0_9 = arith.constant 0 : index
    %c0_10 = arith.constant 0 : index
    %9 = vector.load %arg2[%c0_9, %c0_10] : memref<8x128xi32, #tpu.memory_space<vmem>>, vector<8x128xi32>
    %c8_i32 = arith.constant 8 : i32
    %10 = arith.muli %arg1, %c8_i32 : i32
    %c0_11 = arith.constant 0 : index
    %c0_12 = arith.constant 0 : index
    %c0_13 = arith.constant 0 : index
    %11 = vector.load %arg7[%c0_11, %c0_12, %c0_13] : memref<1x8x128xf32, #tpu.memory_space<vmem>>, vector<1x8x128xf32>
    %12 = vector.shape_cast %11 : vector<1x8x128xf32> to vector<8x128xf32>
    %c0_14 = arith.constant 0 : index
    %c0_15 = arith.constant 0 : index
    %c0_16 = arith.constant 0 : index
    %13 = vector.load %arg8[%c0_14, %c0_15, %c0_16] : memref<1x8x128xf32, #tpu.memory_space<vmem>>, vector<1x8x128xf32>
    %14 = vector.shape_cast %13 : vector<1x8x128xf32> to vector<8x128xf32>
    %c0_i32_17 = arith.constant 0 : i32
    %c8_i32_18 = arith.constant 8 : i32
    %15 = arith.muli %c0_i32_17, %c8_i32_18 : i32
    %16 = tpu.assume_multiple %15, 8 : i32
    %17 = arith.index_cast %16 : i32 to index
    %c0_19 = arith.constant 0 : index
    %18 = vector.load %arg9[%17, %c0_19] : memref<64x512xf32, #tpu.memory_space<vmem>>, vector<8x512xf32>
    %19 = arith.truncf %12 : vector<8x128xf32> to vector<8x128xbf16>
    %cst_20 = arith.constant dense<0.000000e+00> : vector<8x512xf32>
    %20 = tpu.matmul %19, %8, %cst_20 {dimension_numbers = #tpu.dot_dimension_numbers<[1], [0], [0], [1], [0, 0, 1, 1], [], []>} : vector<8x128xbf16>, vector<128x512xbf16>, vector<8x512xf32> -> vector<8x512xf32>
    %21 = arith.addf %18, %20 : vector<8x512xf32>
    %22 = vector.extract_strided_slice %21 {offsets = [0, 0], sizes = [8, 128], strides = [1, 1]} : vector<8x512xf32> to vector<8x128xf32>
    %cst_21 = arith.constant 5.000000e-01 : f32
    %23 = vector.broadcast %cst_21 : f32 to vector<8x128xf32>
    %24 = arith.mulf %23, %22 : vector<8x128xf32>
    %25 = math.tanh %24 : vector<8x128xf32>
    %cst_22 = arith.constant 5.000000e-01 : f32
    %26 = vector.broadcast %cst_22 : f32 to vector<8x128xf32>
    %27 = arith.mulf %26, %25 : vector<8x128xf32>
    %cst_23 = arith.constant 5.000000e-01 : f32
    %28 = vector.broadcast %cst_23 : f32 to vector<8x128xf32>
    %29 = arith.addf %27, %28 : vector<8x128xf32>
    %30 = vector.extract_strided_slice %21 {offsets = [0, 128], sizes = [8, 128], strides = [1, 1]} : vector<8x512xf32> to vector<8x128xf32>
    %cst_24 = arith.constant 5.000000e-01 : f32
    %31 = vector.broadcast %cst_24 : f32 to vector<8x128xf32>
    %32 = arith.mulf %31, %30 : vector<8x128xf32>
    %33 = math.tanh %32 : vector<8x128xf32>
    %cst_25 = arith.constant 5.000000e-01 : f32
    %34 = vector.broadcast %cst_25 : f32 to vector<8x128xf32>
    %35 = arith.mulf %34, %33 : vector<8x128xf32>
    %cst_26 = arith.constant 5.000000e-01 : f32
    %36 = vector.broadcast %cst_26 : f32 to vector<8x128xf32>
    %37 = arith.addf %35, %36 : vector<8x128xf32>
    %38 = vector.extract_strided_slice %21 {offsets = [0, 256], sizes = [8, 128], strides = [1, 1]} : vector<8x512xf32> to vector<8x128xf32>
    %39 = math.tanh %38 : vector<8x128xf32>
    %40 = vector.extract_strided_slice %21 {offsets = [0, 384], sizes = [8, 128], strides = [1, 1]} : vector<8x512xf32> to vector<8x128xf32>
    %cst_27 = arith.constant 5.000000e-01 : f32
    %41 = vector.broadcast %cst_27 : f32 to vector<8x128xf32>
    %42 = arith.mulf %41, %40 : vector<8x128xf32>
    %43 = math.tanh %42 : vector<8x128xf32>
    %cst_28 = arith.constant 5.000000e-01 : f32
    %44 = vector.broadcast %cst_28 : f32 to vector<8x128xf32>
    %45 = arith.mulf %44, %43 : vector<8x128xf32>
    %cst_29 = arith.constant 5.000000e-01 : f32
    %46 = vector.broadcast %cst_29 : f32 to vector<8x128xf32>
    %47 = arith.addf %45, %46 : vector<8x128xf32>
    %48 = arith.mulf %37, %14 : vector<8x128xf32>
    %49 = arith.mulf %29, %39 : vector<8x128xf32>
    %50 = arith.addf %48, %49 : vector<8x128xf32>
    %51 = math.tanh %50 : vector<8x128xf32>
    %52 = arith.mulf %47, %51 : vector<8x128xf32>
    %53 = arith.addi %10, %c0_i32_17 : i32
    %54 = vector.broadcast %53 : i32 to vector<8x128xi32>
    %55 = arith.cmpi slt, %54, %9 : vector<8x128xi32>
    %cst_30 = arith.constant 0.000000e+00 : f32
    %56 = vector.broadcast %cst_30 : f32 to vector<8x128xf32>
    %57 = arith.select %55, %52, %56 : vector<8x128xi1>, vector<8x128xf32>
    %58 = arith.index_cast %c0_i32_17 : i32 to index
    %c0_31 = arith.constant 0 : index
    %c0_32 = arith.constant 0 : index
    %59 = vector.load %arg6[%58, %c0_31, %c0_32] : memref<8x8x128xf32, #tpu.memory_space<vmem>>, vector<1x8x128xf32>
    %60 = vector.shape_cast %59 : vector<1x8x128xf32> to vector<8x128xf32>
    %61 = vector.shape_cast %57 : vector<8x128xf32> to vector<1x8x128xf32>
    tpu.vector_store %arg6[%58, %c0_31, %c0_32], %61 {strides = array<i32>} : memref<8x8x128xf32, #tpu.memory_space<vmem>>, vector<1x8x128xf32>,
    %62 = arith.select %55, %52, %12 : vector<8x128xi1>, vector<8x128xf32>
    %63 = arith.select %55, %50, %14 : vector<8x128xi1>, vector<8x128xf32>
    %c1_i32 = arith.constant 1 : i32
    %c8_i32_33 = arith.constant 8 : i32
    %64 = arith.muli %c1_i32, %c8_i32_33 : i32
    %65 = tpu.assume_multiple %64, 8 : i32
    %66 = arith.index_cast %65 : i32 to index
    %c0_34 = arith.constant 0 : index
    %67 = vector.load %arg9[%66, %c0_34] : memref<64x512xf32, #tpu.memory_space<vmem>>, vector<8x512xf32>
    %68 = arith.truncf %62 : vector<8x128xf32> to vector<8x128xbf16>
    %cst_35 = arith.constant dense<0.000000e+00> : vector<8x512xf32>
    %69 = tpu.matmul %68, %8, %cst_35 {dimension_numbers = #tpu.dot_dimension_numbers<[1], [0], [0], [1], [0, 0, 1, 1], [], []>} : vector<8x128xbf16>, vector<128x512xbf16>, vector<8x512xf32> -> vector<8x512xf32>
    %70 = arith.addf %67, %69 : vector<8x512xf32>
    %71 = vector.extract_strided_slice %70 {offsets = [0, 0], sizes = [8, 128], strides = [1, 1]} : vector<8x512xf32> to vector<8x128xf32>
    %cst_36 = arith.constant 5.000000e-01 : f32
    %72 = vector.broadcast %cst_36 : f32 to vector<8x128xf32>
    %73 = arith.mulf %72, %71 : vector<8x128xf32>
    %74 = math.tanh %73 : vector<8x128xf32>
    %cst_37 = arith.constant 5.000000e-01 : f32
    %75 = vector.broadcast %cst_37 : f32 to vector<8x128xf32>
    %76 = arith.mulf %75, %74 : vector<8x128xf32>
    %cst_38 = arith.constant 5.000000e-01 : f32
    %77 = vector.broadcast %cst_38 : f32 to vector<8x128xf32>
    %78 = arith.addf %76, %77 : vector<8x128xf32>
    %79 = vector.extract_strided_slice %70 {offsets = [0, 128], sizes = [8, 128], strides = [1, 1]} : vector<8x512xf32> to vector<8x128xf32>
    %cst_39 = arith.constant 5.000000e-01 : f32
    %80 = vector.broadcast %cst_39 : f32 to vector<8x128xf32>
    %81 = arith.mulf %80, %79 : vector<8x128xf32>
    %82 = math.tanh %81 : vector<8x128xf32>
    %cst_40 = arith.constant 5.000000e-01 : f32
    %83 = vector.broadcast %cst_40 : f32 to vector<8x128xf32>
    %84 = arith.mulf %83, %82 : vector<8x128xf32>
    %cst_41 = arith.constant 5.000000e-01 : f32
    %85 = vector.broadcast %cst_41 : f32 to vector<8x128xf32>
    %86 = arith.addf %84, %85 : vector<8x128xf32>
    %87 = vector.extract_strided_slice %70 {offsets = [0, 256], sizes = [8, 128], strides = [1, 1]} : vector<8x512xf32> to vector<8x128xf32>
    %88 = math.tanh %87 : vector<8x128xf32>
    %89 = vector.extract_strided_slice %70 {offsets = [0, 384], sizes = [8, 128], strides = [1, 1]} : vector<8x512xf32> to vector<8x128xf32>
    %cst_42 = arith.constant 5.000000e-01 : f32
    %90 = vector.broadcast %cst_42 : f32 to vector<8x128xf32>
    %91 = arith.mulf %90, %89 : vector<8x128xf32>
    %92 = math.tanh %91 : vector<8x128xf32>
    %cst_43 = arith.constant 5.000000e-01 : f32
    %93 = vector.broadcast %cst_43 : f32 to vector<8x128xf32>
    %94 = arith.mulf %93, %92 : vector<8x128xf32>
    %cst_44 = arith.constant 5.000000e-01 : f32
    %95 = vector.broadcast %cst_44 : f32 to vector<8x128xf32>
    %96 = arith.addf %94, %95 : vector<8x128xf32>
    %97 = arith.mulf %86, %63 : vector<8x128xf32>
    %98 = arith.mulf %78, %88 : vector<8x128xf32>
    %99 = arith.addf %97, %98 : vector<8x128xf32>
    %100 = math.tanh %99 : vector<8x128xf32>
    %101 = arith.mulf %96, %100 : vector<8x128xf32>
    %102 = arith.addi %10, %c1_i32 : i32
    %103 = vector.broadcast %102 : i32 to vector<8x128xi32>
    %104 = arith.cmpi slt, %103, %9 : vector<8x128xi32>
    %cst_45 = arith.constant 0.000000e+00 : f32
    %105 = vector.broadcast %cst_45 : f32 to vector<8x128xf32>
    %106 = arith.select %104, %101, %105 : vector<8x128xi1>, vector<8x128xf32>
    %107 = arith.index_cast %c1_i32 : i32 to index
    %c0_46 = arith.constant 0 : index
    %c0_47 = arith.constant 0 : index
    %108 = vector.load %arg6[%107, %c0_46, %c0_47] : memref<8x8x128xf32, #tpu.memory_space<vmem>>, vector<1x8x128xf32>
    %109 = vector.shape_cast %108 : vector<1x8x128xf32> to vector<8x128xf32>
    %110 = vector.shape_cast %106 : vector<8x128xf32> to vector<1x8x128xf32>
    tpu.vector_store %arg6[%107, %c0_46, %c0_47], %110 {strides = array<i32>} : memref<8x8x128xf32, #tpu.memory_space<vmem>>, vector<1x8x128xf32>,
    %111 = arith.select %104, %101, %62 : vector<8x128xi1>, vector<8x128xf32>
    %112 = arith.select %104, %99, %63 : vector<8x128xi1>, vector<8x128xf32>
    %c2_i32 = arith.constant 2 : i32
    %c8_i32_48 = arith.constant 8 : i32
    %113 = arith.muli %c2_i32, %c8_i32_48 : i32
    %114 = tpu.assume_multiple %113, 8 : i32
    %115 = arith.index_cast %114 : i32 to index
    %c0_49 = arith.constant 0 : index
    %116 = vector.load %arg9[%115, %c0_49] : memref<64x512xf32, #tpu.memory_space<vmem>>, vector<8x512xf32>
    %117 = arith.truncf %111 : vector<8x128xf32> to vector<8x128xbf16>
    %cst_50 = arith.constant dense<0.000000e+00> : vector<8x512xf32>
    %118 = tpu.matmul %117, %8, %cst_50 {dimension_numbers = #tpu.dot_dimension_numbers<[1], [0], [0], [1], [0, 0, 1, 1], [], []>} : vector<8x128xbf16>, vector<128x512xbf16>, vector<8x512xf32> -> vector<8x512xf32>
    %119 = arith.addf %116, %118 : vector<8x512xf32>
    %120 = vector.extract_strided_slice %119 {offsets = [0, 0], sizes = [8, 128], strides = [1, 1]} : vector<8x512xf32> to vector<8x128xf32>
    %cst_51 = arith.constant 5.000000e-01 : f32
    %121 = vector.broadcast %cst_51 : f32 to vector<8x128xf32>
    %122 = arith.mulf %121, %120 : vector<8x128xf32>
    %123 = math.tanh %122 : vector<8x128xf32>
    %cst_52 = arith.constant 5.000000e-01 : f32
    %124 = vector.broadcast %cst_52 : f32 to vector<8x128xf32>
    %125 = arith.mulf %124, %123 : vector<8x128xf32>
    %cst_53 = arith.constant 5.000000e-01 : f32
    %126 = vector.broadcast %cst_53 : f32 to vector<8x128xf32>
    %127 = arith.addf %125, %126 : vector<8x128xf32>
    %128 = vector.extract_strided_slice %119 {offsets = [0, 128], sizes = [8, 128], strides = [1, 1]} : vector<8x512xf32> to vector<8x128xf32>
    %cst_54 = arith.constant 5.000000e-01 : f32
    %129 = vector.broadcast %cst_54 : f32 to vector<8x128xf32>
    %130 = arith.mulf %129, %128 : vector<8x128xf32>
    %131 = math.tanh %130 : vector<8x128xf32>
    %cst_55 = arith.constant 5.000000e-01 : f32
    %132 = vector.broadcast %cst_55 : f32 to vector<8x128xf32>
    %133 = arith.mulf %132, %131 : vector<8x128xf32>
    %cst_56 = arith.constant 5.000000e-01 : f32
    %134 = vector.broadcast %cst_56 : f32 to vector<8x128xf32>
    %135 = arith.addf %133, %134 : vector<8x128xf32>
    %136 = vector.extract_strided_slice %119 {offsets = [0, 256], sizes = [8, 128], strides = [1, 1]} : vector<8x512xf32> to vector<8x128xf32>
    %137 = math.tanh %136 : vector<8x128xf32>
    %138 = vector.extract_strided_slice %119 {offsets = [0, 384], sizes = [8, 128], strides = [1, 1]} : vector<8x512xf32> to vector<8x128xf32>
    %cst_57 = arith.constant 5.000000e-01 : f32
    %139 = vector.broadcast %cst_57 : f32 to vector<8x128xf32>
    %140 = arith.mulf %139, %138 : vector<8x128xf32>
    %141 = math.tanh %140 : vector<8x128xf32>
    %cst_58 = arith.constant 5.000000e-01 : f32
    %142 = vector.broadcast %cst_58 : f32 to vector<8x128xf32>
    %143 = arith.mulf %142, %141 : vector<8x128xf32>
    %cst_59 = arith.constant 5.000000e-01 : f32
    %144 = vector.broadcast %cst_59 : f32 to vector<8x128xf32>
    %145 = arith.addf %143, %144 : vector<8x128xf32>
    %146 = arith.mulf %135, %112 : vector<8x128xf32>
    %147 = arith.mulf %127, %137 : vector<8x128xf32>
    %148 = arith.addf %146, %147 : vector<8x128xf32>
    %149 = math.tanh %148 : vector<8x128xf32>
    %150 = arith.mulf %145, %149 : vector<8x128xf32>
    %151 = arith.addi %10, %c2_i32 : i32
    %152 = vector.broadcast %151 : i32 to vector<8x128xi32>
    %153 = arith.cmpi slt, %152, %9 : vector<8x128xi32>
    %cst_60 = arith.constant 0.000000e+00 : f32
    %154 = vector.broadcast %cst_60 : f32 to vector<8x128xf32>
    %155 = arith.select %153, %150, %154 : vector<8x128xi1>, vector<8x128xf32>
    %156 = arith.index_cast %c2_i32 : i32 to index
    %c0_61 = arith.constant 0 : index
    %c0_62 = arith.constant 0 : index
    %157 = vector.load %arg6[%156, %c0_61, %c0_62] : memref<8x8x128xf32, #tpu.memory_space<vmem>>, vector<1x8x128xf32>
    %158 = vector.shape_cast %157 : vector<1x8x128xf32> to vector<8x128xf32>
    %159 = vector.shape_cast %155 : vector<8x128xf32> to vector<1x8x128xf32>
    tpu.vector_store %arg6[%156, %c0_61, %c0_62], %159 {strides = array<i32>} : memref<8x8x128xf32, #tpu.memory_space<vmem>>, vector<1x8x128xf32>,
    %160 = arith.select %153, %150, %111 : vector<8x128xi1>, vector<8x128xf32>
    %161 = arith.select %153, %148, %112 : vector<8x128xi1>, vector<8x128xf32>
    %c3_i32 = arith.constant 3 : i32
    %c8_i32_63 = arith.constant 8 : i32
    %162 = arith.muli %c3_i32, %c8_i32_63 : i32
    %163 = tpu.assume_multiple %162, 8 : i32
    %164 = arith.index_cast %163 : i32 to index
    %c0_64 = arith.constant 0 : index
    %165 = vector.load %arg9[%164, %c0_64] : memref<64x512xf32, #tpu.memory_space<vmem>>, vector<8x512xf32>
    %166 = arith.truncf %160 : vector<8x128xf32> to vector<8x128xbf16>
    %cst_65 = arith.constant dense<0.000000e+00> : vector<8x512xf32>
    %167 = tpu.matmul %166, %8, %cst_65 {dimension_numbers = #tpu.dot_dimension_numbers<[1], [0], [0], [1], [0, 0, 1, 1], [], []>} : vector<8x128xbf16>, vector<128x512xbf16>, vector<8x512xf32> -> vector<8x512xf32>
    %168 = arith.addf %165, %167 : vector<8x512xf32>
    %169 = vector.extract_strided_slice %168 {offsets = [0, 0], sizes = [8, 128], strides = [1, 1]} : vector<8x512xf32> to vector<8x128xf32>
    %cst_66 = arith.constant 5.000000e-01 : f32
    %170 = vector.broadcast %cst_66 : f32 to vector<8x128xf32>
    %171 = arith.mulf %170, %169 : vector<8x128xf32>
    %172 = math.tanh %171 : vector<8x128xf32>
    %cst_67 = arith.constant 5.000000e-01 : f32
    %173 = vector.broadcast %cst_67 : f32 to vector<8x128xf32>
    %174 = arith.mulf %173, %172 : vector<8x128xf32>
    %cst_68 = arith.constant 5.000000e-01 : f32
    %175 = vector.broadcast %cst_68 : f32 to vector<8x128xf32>
    %176 = arith.addf %174, %175 : vector<8x128xf32>
    %177 = vector.extract_strided_slice %168 {offsets = [0, 128], sizes = [8, 128], strides = [1, 1]} : vector<8x512xf32> to vector<8x128xf32>
    %cst_69 = arith.constant 5.000000e-01 : f32
    %178 = vector.broadcast %cst_69 : f32 to vector<8x128xf32>
    %179 = arith.mulf %178, %177 : vector<8x128xf32>
    %180 = math.tanh %179 : vector<8x128xf32>
    %cst_70 = arith.constant 5.000000e-01 : f32
    %181 = vector.broadcast %cst_70 : f32 to vector<8x128xf32>
    %182 = arith.mulf %181, %180 : vector<8x128xf32>
    %cst_71 = arith.constant 5.000000e-01 : f32
    %183 = vector.broadcast %cst_71 : f32 to vector<8x128xf32>
    %184 = arith.addf %182, %183 : vector<8x128xf32>
    %185 = vector.extract_strided_slice %168 {offsets = [0, 256], sizes = [8, 128], strides = [1, 1]} : vector<8x512xf32> to vector<8x128xf32>
    %186 = math.tanh %185 : vector<8x128xf32>
    %187 = vector.extract_strided_slice %168 {offsets = [0, 384], sizes = [8, 128], strides = [1, 1]} : vector<8x512xf32> to vector<8x128xf32>
    %cst_72 = arith.constant 5.000000e-01 : f32
    %188 = vector.broadcast %cst_72 : f32 to vector<8x128xf32>
    %189 = arith.mulf %188, %187 : vector<8x128xf32>
    %190 = math.tanh %189 : vector<8x128xf32>
    %cst_73 = arith.constant 5.000000e-01 : f32
    %191 = vector.broadcast %cst_73 : f32 to vector<8x128xf32>
    %192 = arith.mulf %191, %190 : vector<8x128xf32>
    %cst_74 = arith.constant 5.000000e-01 : f32
    %193 = vector.broadcast %cst_74 : f32 to vector<8x128xf32>
    %194 = arith.addf %192, %193 : vector<8x128xf32>
    %195 = arith.mulf %184, %161 : vector<8x128xf32>
    %196 = arith.mulf %176, %186 : vector<8x128xf32>
    %197 = arith.addf %195, %196 : vector<8x128xf32>
    %198 = math.tanh %197 : vector<8x128xf32>
    %199 = arith.mulf %194, %198 : vector<8x128xf32>
    %200 = arith.addi %10, %c3_i32 : i32
    %201 = vector.broadcast %200 : i32 to vector<8x128xi32>
    %202 = arith.cmpi slt, %201, %9 : vector<8x128xi32>
    %cst_75 = arith.constant 0.000000e+00 : f32
    %203 = vector.broadcast %cst_75 : f32 to vector<8x128xf32>
    %204 = arith.select %202, %199, %203 : vector<8x128xi1>, vector<8x128xf32>
    %205 = arith.index_cast %c3_i32 : i32 to index
    %c0_76 = arith.constant 0 : index
    %c0_77 = arith.constant 0 : index
    %206 = vector.load %arg6[%205, %c0_76, %c0_77] : memref<8x8x128xf32, #tpu.memory_space<vmem>>, vector<1x8x128xf32>
    %207 = vector.shape_cast %206 : vector<1x8x128xf32> to vector<8x128xf32>
    %208 = vector.shape_cast %204 : vector<8x128xf32> to vector<1x8x128xf32>
    tpu.vector_store %arg6[%205, %c0_76, %c0_77], %208 {strides = array<i32>} : memref<8x8x128xf32, #tpu.memory_space<vmem>>, vector<1x8x128xf32>,
    %209 = arith.select %202, %199, %160 : vector<8x128xi1>, vector<8x128xf32>
    %210 = arith.select %202, %197, %161 : vector<8x128xi1>, vector<8x128xf32>
    %c4_i32 = arith.constant 4 : i32
    %c8_i32_78 = arith.constant 8 : i32
    %211 = arith.muli %c4_i32, %c8_i32_78 : i32
    %212 = tpu.assume_multiple %211, 8 : i32
    %213 = arith.index_cast %212 : i32 to index
    %c0_79 = arith.constant 0 : index
    %214 = vector.load %arg9[%213, %c0_79] : memref<64x512xf32, #tpu.memory_space<vmem>>, vector<8x512xf32>
    %215 = arith.truncf %209 : vector<8x128xf32> to vector<8x128xbf16>
    %cst_80 = arith.constant dense<0.000000e+00> : vector<8x512xf32>
    %216 = tpu.matmul %215, %8, %cst_80 {dimension_numbers = #tpu.dot_dimension_numbers<[1], [0], [0], [1], [0, 0, 1, 1], [], []>} : vector<8x128xbf16>, vector<128x512xbf16>, vector<8x512xf32> -> vector<8x512xf32>
    %217 = arith.addf %214, %216 : vector<8x512xf32>
    %218 = vector.extract_strided_slice %217 {offsets = [0, 0], sizes = [8, 128], strides = [1, 1]} : vector<8x512xf32> to vector<8x128xf32>
    %cst_81 = arith.constant 5.000000e-01 : f32
    %219 = vector.broadcast %cst_81 : f32 to vector<8x128xf32>
    %220 = arith.mulf %219, %218 : vector<8x128xf32>
    %221 = math.tanh %220 : vector<8x128xf32>
    %cst_82 = arith.constant 5.000000e-01 : f32
    %222 = vector.broadcast %cst_82 : f32 to vector<8x128xf32>
    %223 = arith.mulf %222, %221 : vector<8x128xf32>
    %cst_83 = arith.constant 5.000000e-01 : f32
    %224 = vector.broadcast %cst_83 : f32 to vector<8x128xf32>
    %225 = arith.addf %223, %224 : vector<8x128xf32>
    %226 = vector.extract_strided_slice %217 {offsets = [0, 128], sizes = [8, 128], strides = [1, 1]} : vector<8x512xf32> to vector<8x128xf32>
    %cst_84 = arith.constant 5.000000e-01 : f32
    %227 = vector.broadcast %cst_84 : f32 to vector<8x128xf32>
    %228 = arith.mulf %227, %226 : vector<8x128xf32>
    %229 = math.tanh %228 : vector<8x128xf32>
    %cst_85 = arith.constant 5.000000e-01 : f32
    %230 = vector.broadcast %cst_85 : f32 to vector<8x128xf32>
    %231 = arith.mulf %230, %229 : vector<8x128xf32>
    %cst_86 = arith.constant 5.000000e-01 : f32
    %232 = vector.broadcast %cst_86 : f32 to vector<8x128xf32>
    %233 = arith.addf %231, %232 : vector<8x128xf32>
    %234 = vector.extract_strided_slice %217 {offsets = [0, 256], sizes = [8, 128], strides = [1, 1]} : vector<8x512xf32> to vector<8x128xf32>
    %235 = math.tanh %234 : vector<8x128xf32>
    %236 = vector.extract_strided_slice %217 {offsets = [0, 384], sizes = [8, 128], strides = [1, 1]} : vector<8x512xf32> to vector<8x128xf32>
    %cst_87 = arith.constant 5.000000e-01 : f32
    %237 = vector.broadcast %cst_87 : f32 to vector<8x128xf32>
    %238 = arith.mulf %237, %236 : vector<8x128xf32>
    %239 = math.tanh %238 : vector<8x128xf32>
    %cst_88 = arith.constant 5.000000e-01 : f32
    %240 = vector.broadcast %cst_88 : f32 to vector<8x128xf32>
    %241 = arith.mulf %240, %239 : vector<8x128xf32>
    %cst_89 = arith.constant 5.000000e-01 : f32
    %242 = vector.broadcast %cst_89 : f32 to vector<8x128xf32>
    %243 = arith.addf %241, %242 : vector<8x128xf32>
    %244 = arith.mulf %233, %210 : vector<8x128xf32>
    %245 = arith.mulf %225, %235 : vector<8x128xf32>
    %246 = arith.addf %244, %245 : vector<8x128xf32>
    %247 = math.tanh %246 : vector<8x128xf32>
    %248 = arith.mulf %243, %247 : vector<8x128xf32>
    %249 = arith.addi %10, %c4_i32 : i32
    %250 = vector.broadcast %249 : i32 to vector<8x128xi32>
    %251 = arith.cmpi slt, %250, %9 : vector<8x128xi32>
    %cst_90 = arith.constant 0.000000e+00 : f32
    %252 = vector.broadcast %cst_90 : f32 to vector<8x128xf32>
    %253 = arith.select %251, %248, %252 : vector<8x128xi1>, vector<8x128xf32>
    %254 = arith.index_cast %c4_i32 : i32 to index
    %c0_91 = arith.constant 0 : index
    %c0_92 = arith.constant 0 : index
    %255 = vector.load %arg6[%254, %c0_91, %c0_92] : memref<8x8x128xf32, #tpu.memory_space<vmem>>, vector<1x8x128xf32>
    %256 = vector.shape_cast %255 : vector<1x8x128xf32> to vector<8x128xf32>
    %257 = vector.shape_cast %253 : vector<8x128xf32> to vector<1x8x128xf32>
    tpu.vector_store %arg6[%254, %c0_91, %c0_92], %257 {strides = array<i32>} : memref<8x8x128xf32, #tpu.memory_space<vmem>>, vector<1x8x128xf32>,
    %258 = arith.select %251, %248, %209 : vector<8x128xi1>, vector<8x128xf32>
    %259 = arith.select %251, %246, %210 : vector<8x128xi1>, vector<8x128xf32>
    %c5_i32 = arith.constant 5 : i32
    %c8_i32_93 = arith.constant 8 : i32
    %260 = arith.muli %c5_i32, %c8_i32_93 : i32
    %261 = tpu.assume_multiple %260, 8 : i32
    %262 = arith.index_cast %261 : i32 to index
    %c0_94 = arith.constant 0 : index
    %263 = vector.load %arg9[%262, %c0_94] : memref<64x512xf32, #tpu.memory_space<vmem>>, vector<8x512xf32>
    %264 = arith.truncf %258 : vector<8x128xf32> to vector<8x128xbf16>
    %cst_95 = arith.constant dense<0.000000e+00> : vector<8x512xf32>
    %265 = tpu.matmul %264, %8, %cst_95 {dimension_numbers = #tpu.dot_dimension_numbers<[1], [0], [0], [1], [0, 0, 1, 1], [], []>} : vector<8x128xbf16>, vector<128x512xbf16>, vector<8x512xf32> -> vector<8x512xf32>
    %266 = arith.addf %263, %265 : vector<8x512xf32>
    %267 = vector.extract_strided_slice %266 {offsets = [0, 0], sizes = [8, 128], strides = [1, 1]} : vector<8x512xf32> to vector<8x128xf32>
    %cst_96 = arith.constant 5.000000e-01 : f32
    %268 = vector.broadcast %cst_96 : f32 to vector<8x128xf32>
    %269 = arith.mulf %268, %267 : vector<8x128xf32>
    %270 = math.tanh %269 : vector<8x128xf32>
    %cst_97 = arith.constant 5.000000e-01 : f32
    %271 = vector.broadcast %cst_97 : f32 to vector<8x128xf32>
    %272 = arith.mulf %271, %270 : vector<8x128xf32>
    %cst_98 = arith.constant 5.000000e-01 : f32
    %273 = vector.broadcast %cst_98 : f32 to vector<8x128xf32>
    %274 = arith.addf %272, %273 : vector<8x128xf32>
    %275 = vector.extract_strided_slice %266 {offsets = [0, 128], sizes = [8, 128], strides = [1, 1]} : vector<8x512xf32> to vector<8x128xf32>
    %cst_99 = arith.constant 5.000000e-01 : f32
    %276 = vector.broadcast %cst_99 : f32 to vector<8x128xf32>
    %277 = arith.mulf %276, %275 : vector<8x128xf32>
    %278 = math.tanh %277 : vector<8x128xf32>
    %cst_100 = arith.constant 5.000000e-01 : f32
    %279 = vector.broadcast %cst_100 : f32 to vector<8x128xf32>
    %280 = arith.mulf %279, %278 : vector<8x128xf32>
    %cst_101 = arith.constant 5.000000e-01 : f32
    %281 = vector.broadcast %cst_101 : f32 to vector<8x128xf32>
    %282 = arith.addf %280, %281 : vector<8x128xf32>
    %283 = vector.extract_strided_slice %266 {offsets = [0, 256], sizes = [8, 128], strides = [1, 1]} : vector<8x512xf32> to vector<8x128xf32>
    %284 = math.tanh %283 : vector<8x128xf32>
    %285 = vector.extract_strided_slice %266 {offsets = [0, 384], sizes = [8, 128], strides = [1, 1]} : vector<8x512xf32> to vector<8x128xf32>
    %cst_102 = arith.constant 5.000000e-01 : f32
    %286 = vector.broadcast %cst_102 : f32 to vector<8x128xf32>
    %287 = arith.mulf %286, %285 : vector<8x128xf32>
    %288 = math.tanh %287 : vector<8x128xf32>
    %cst_103 = arith.constant 5.000000e-01 : f32
    %289 = vector.broadcast %cst_103 : f32 to vector<8x128xf32>
    %290 = arith.mulf %289, %288 : vector<8x128xf32>
    %cst_104 = arith.constant 5.000000e-01 : f32
    %291 = vector.broadcast %cst_104 : f32 to vector<8x128xf32>
    %292 = arith.addf %290, %291 : vector<8x128xf32>
    %293 = arith.mulf %282, %259 : vector<8x128xf32>
    %294 = arith.mulf %274, %284 : vector<8x128xf32>
    %295 = arith.addf %293, %294 : vector<8x128xf32>
    %296 = math.tanh %295 : vector<8x128xf32>
    %297 = arith.mulf %292, %296 : vector<8x128xf32>
    %298 = arith.addi %10, %c5_i32 : i32
    %299 = vector.broadcast %298 : i32 to vector<8x128xi32>
    %300 = arith.cmpi slt, %299, %9 : vector<8x128xi32>
    %cst_105 = arith.constant 0.000000e+00 : f32
    %301 = vector.broadcast %cst_105 : f32 to vector<8x128xf32>
    %302 = arith.select %300, %297, %301 : vector<8x128xi1>, vector<8x128xf32>
    %303 = arith.index_cast %c5_i32 : i32 to index
    %c0_106 = arith.constant 0 : index
    %c0_107 = arith.constant 0 : index
    %304 = vector.load %arg6[%303, %c0_106, %c0_107] : memref<8x8x128xf32, #tpu.memory_space<vmem>>, vector<1x8x128xf32>
    %305 = vector.shape_cast %304 : vector<1x8x128xf32> to vector<8x128xf32>
    %306 = vector.shape_cast %302 : vector<8x128xf32> to vector<1x8x128xf32>
    tpu.vector_store %arg6[%303, %c0_106, %c0_107], %306 {strides = array<i32>} : memref<8x8x128xf32, #tpu.memory_space<vmem>>, vector<1x8x128xf32>,
    %307 = arith.select %300, %297, %258 : vector<8x128xi1>, vector<8x128xf32>
    %308 = arith.select %300, %295, %259 : vector<8x128xi1>, vector<8x128xf32>
    %c6_i32 = arith.constant 6 : i32
    %c8_i32_108 = arith.constant 8 : i32
    %309 = arith.muli %c6_i32, %c8_i32_108 : i32
    %310 = tpu.assume_multiple %309, 8 : i32
    %311 = arith.index_cast %310 : i32 to index
    %c0_109 = arith.constant 0 : index
    %312 = vector.load %arg9[%311, %c0_109] : memref<64x512xf32, #tpu.memory_space<vmem>>, vector<8x512xf32>
    %313 = arith.truncf %307 : vector<8x128xf32> to vector<8x128xbf16>
    %cst_110 = arith.constant dense<0.000000e+00> : vector<8x512xf32>
    %314 = tpu.matmul %313, %8, %cst_110 {dimension_numbers = #tpu.dot_dimension_numbers<[1], [0], [0], [1], [0, 0, 1, 1], [], []>} : vector<8x128xbf16>, vector<128x512xbf16>, vector<8x512xf32> -> vector<8x512xf32>
    %315 = arith.addf %312, %314 : vector<8x512xf32>
    %316 = vector.extract_strided_slice %315 {offsets = [0, 0], sizes = [8, 128], strides = [1, 1]} : vector<8x512xf32> to vector<8x128xf32>
    %cst_111 = arith.constant 5.000000e-01 : f32
    %317 = vector.broadcast %cst_111 : f32 to vector<8x128xf32>
    %318 = arith.mulf %317, %316 : vector<8x128xf32>
    %319 = math.tanh %318 : vector<8x128xf32>
    %cst_112 = arith.constant 5.000000e-01 : f32
    %320 = vector.broadcast %cst_112 : f32 to vector<8x128xf32>
    %321 = arith.mulf %320, %319 : vector<8x128xf32>
    %cst_113 = arith.constant 5.000000e-01 : f32
    %322 = vector.broadcast %cst_113 : f32 to vector<8x128xf32>
    %323 = arith.addf %321, %322 : vector<8x128xf32>
    %324 = vector.extract_strided_slice %315 {offsets = [0, 128], sizes = [8, 128], strides = [1, 1]} : vector<8x512xf32> to vector<8x128xf32>
    %cst_114 = arith.constant 5.000000e-01 : f32
    %325 = vector.broadcast %cst_114 : f32 to vector<8x128xf32>
    %326 = arith.mulf %325, %324 : vector<8x128xf32>
    %327 = math.tanh %326 : vector<8x128xf32>
    %cst_115 = arith.constant 5.000000e-01 : f32
    %328 = vector.broadcast %cst_115 : f32 to vector<8x128xf32>
    %329 = arith.mulf %328, %327 : vector<8x128xf32>
    %cst_116 = arith.constant 5.000000e-01 : f32
    %330 = vector.broadcast %cst_116 : f32 to vector<8x128xf32>
    %331 = arith.addf %329, %330 : vector<8x128xf32>
    %332 = vector.extract_strided_slice %315 {offsets = [0, 256], sizes = [8, 128], strides = [1, 1]} : vector<8x512xf32> to vector<8x128xf32>
    %333 = math.tanh %332 : vector<8x128xf32>
    %334 = vector.extract_strided_slice %315 {offsets = [0, 384], sizes = [8, 128], strides = [1, 1]} : vector<8x512xf32> to vector<8x128xf32>
    %cst_117 = arith.constant 5.000000e-01 : f32
    %335 = vector.broadcast %cst_117 : f32 to vector<8x128xf32>
    %336 = arith.mulf %335, %334 : vector<8x128xf32>
    %337 = math.tanh %336 : vector<8x128xf32>
    %cst_118 = arith.constant 5.000000e-01 : f32
    %338 = vector.broadcast %cst_118 : f32 to vector<8x128xf32>
    %339 = arith.mulf %338, %337 : vector<8x128xf32>
    %cst_119 = arith.constant 5.000000e-01 : f32
    %340 = vector.broadcast %cst_119 : f32 to vector<8x128xf32>
    %341 = arith.addf %339, %340 : vector<8x128xf32>
    %342 = arith.mulf %331, %308 : vector<8x128xf32>
    %343 = arith.mulf %323, %333 : vector<8x128xf32>
    %344 = arith.addf %342, %343 : vector<8x128xf32>
    %345 = math.tanh %344 : vector<8x128xf32>
    %346 = arith.mulf %341, %345 : vector<8x128xf32>
    %347 = arith.addi %10, %c6_i32 : i32
    %348 = vector.broadcast %347 : i32 to vector<8x128xi32>
    %349 = arith.cmpi slt, %348, %9 : vector<8x128xi32>
    %cst_120 = arith.constant 0.000000e+00 : f32
    %350 = vector.broadcast %cst_120 : f32 to vector<8x128xf32>
    %351 = arith.select %349, %346, %350 : vector<8x128xi1>, vector<8x128xf32>
    %352 = arith.index_cast %c6_i32 : i32 to index
    %c0_121 = arith.constant 0 : index
    %c0_122 = arith.constant 0 : index
    %353 = vector.load %arg6[%352, %c0_121, %c0_122] : memref<8x8x128xf32, #tpu.memory_space<vmem>>, vector<1x8x128xf32>
    %354 = vector.shape_cast %353 : vector<1x8x128xf32> to vector<8x128xf32>
    %355 = vector.shape_cast %351 : vector<8x128xf32> to vector<1x8x128xf32>
    tpu.vector_store %arg6[%352, %c0_121, %c0_122], %355 {strides = array<i32>} : memref<8x8x128xf32, #tpu.memory_space<vmem>>, vector<1x8x128xf32>,
    %356 = arith.select %349, %346, %307 : vector<8x128xi1>, vector<8x128xf32>
    %357 = arith.select %349, %344, %308 : vector<8x128xi1>, vector<8x128xf32>
    %c7_i32 = arith.constant 7 : i32
    %c8_i32_123 = arith.constant 8 : i32
    %358 = arith.muli %c7_i32, %c8_i32_123 : i32
    %359 = tpu.assume_multiple %358, 8 : i32
    %360 = arith.index_cast %359 : i32 to index
    %c0_124 = arith.constant 0 : index
    %361 = vector.load %arg9[%360, %c0_124] : memref<64x512xf32, #tpu.memory_space<vmem>>, vector<8x512xf32>
    %362 = arith.truncf %356 : vector<8x128xf32> to vector<8x128xbf16>
    %cst_125 = arith.constant dense<0.000000e+00> : vector<8x512xf32>
    %363 = tpu.matmul %362, %8, %cst_125 {dimension_numbers = #tpu.dot_dimension_numbers<[1], [0], [0], [1], [0, 0, 1, 1], [], []>} : vector<8x128xbf16>, vector<128x512xbf16>, vector<8x512xf32> -> vector<8x512xf32>
    %364 = arith.addf %361, %363 : vector<8x512xf32>
    %365 = vector.extract_strided_slice %364 {offsets = [0, 0], sizes = [8, 128], strides = [1, 1]} : vector<8x512xf32> to vector<8x128xf32>
    %cst_126 = arith.constant 5.000000e-01 : f32
    %366 = vector.broadcast %cst_126 : f32 to vector<8x128xf32>
    %367 = arith.mulf %366, %365 : vector<8x128xf32>
    %368 = math.tanh %367 : vector<8x128xf32>
    %cst_127 = arith.constant 5.000000e-01 : f32
    %369 = vector.broadcast %cst_127 : f32 to vector<8x128xf32>
    %370 = arith.mulf %369, %368 : vector<8x128xf32>
    %cst_128 = arith.constant 5.000000e-01 : f32
    %371 = vector.broadcast %cst_128 : f32 to vector<8x128xf32>
    %372 = arith.addf %370, %371 : vector<8x128xf32>
    %373 = vector.extract_strided_slice %364 {offsets = [0, 128], sizes = [8, 128], strides = [1, 1]} : vector<8x512xf32> to vector<8x128xf32>
    %cst_129 = arith.constant 5.000000e-01 : f32
    %374 = vector.broadcast %cst_129 : f32 to vector<8x128xf32>
    %375 = arith.mulf %374, %373 : vector<8x128xf32>
    %376 = math.tanh %375 : vector<8x128xf32>
    %cst_130 = arith.constant 5.000000e-01 : f32
    %377 = vector.broadcast %cst_130 : f32 to vector<8x128xf32>
    %378 = arith.mulf %377, %376 : vector<8x128xf32>
    %cst_131 = arith.constant 5.000000e-01 : f32
    %379 = vector.broadcast %cst_131 : f32 to vector<8x128xf32>
    %380 = arith.addf %378, %379 : vector<8x128xf32>
    %381 = vector.extract_strided_slice %364 {offsets = [0, 256], sizes = [8, 128], strides = [1, 1]} : vector<8x512xf32> to vector<8x128xf32>
    %382 = math.tanh %381 : vector<8x128xf32>
    %383 = vector.extract_strided_slice %364 {offsets = [0, 384], sizes = [8, 128], strides = [1, 1]} : vector<8x512xf32> to vector<8x128xf32>
    %cst_132 = arith.constant 5.000000e-01 : f32
    %384 = vector.broadcast %cst_132 : f32 to vector<8x128xf32>
    %385 = arith.mulf %384, %383 : vector<8x128xf32>
    %386 = math.tanh %385 : vector<8x128xf32>
    %cst_133 = arith.constant 5.000000e-01 : f32
    %387 = vector.broadcast %cst_133 : f32 to vector<8x128xf32>
    %388 = arith.mulf %387, %386 : vector<8x128xf32>
    %cst_134 = arith.constant 5.000000e-01 : f32
    %389 = vector.broadcast %cst_134 : f32 to vector<8x128xf32>
    %390 = arith.addf %388, %389 : vector<8x128xf32>
    %391 = arith.mulf %380, %357 : vector<8x128xf32>
    %392 = arith.mulf %372, %382 : vector<8x128xf32>
    %393 = arith.addf %391, %392 : vector<8x128xf32>
    %394 = math.tanh %393 : vector<8x128xf32>
    %395 = arith.mulf %390, %394 : vector<8x128xf32>
    %396 = arith.addi %10, %c7_i32 : i32
    %397 = vector.broadcast %396 : i32 to vector<8x128xi32>
    %398 = arith.cmpi slt, %397, %9 : vector<8x128xi32>
    %cst_135 = arith.constant 0.000000e+00 : f32
    %399 = vector.broadcast %cst_135 : f32 to vector<8x128xf32>
    %400 = arith.select %398, %395, %399 : vector<8x128xi1>, vector<8x128xf32>
    %401 = arith.index_cast %c7_i32 : i32 to index
    %c0_136 = arith.constant 0 : index
    %c0_137 = arith.constant 0 : index
    %402 = vector.load %arg6[%401, %c0_136, %c0_137] : memref<8x8x128xf32, #tpu.memory_space<vmem>>, vector<1x8x128xf32>
    %403 = vector.shape_cast %402 : vector<1x8x128xf32> to vector<8x128xf32>
    %404 = vector.shape_cast %400 : vector<8x128xf32> to vector<1x8x128xf32>
    tpu.vector_store %arg6[%401, %c0_136, %c0_137], %404 {strides = array<i32>} : memref<8x8x128xf32, #tpu.memory_space<vmem>>, vector<1x8x128xf32>,
    %405 = arith.select %398, %395, %356 : vector<8x128xi1>, vector<8x128xf32>
    %406 = arith.select %398, %393, %357 : vector<8x128xi1>, vector<8x128xf32>
    %c8_i32_138 = arith.constant 8 : i32
    %c0_139 = arith.constant 0 : index
    %c0_140 = arith.constant 0 : index
    %c0_141 = arith.constant 0 : index
    %407 = vector.load %arg7[%c0_139, %c0_140, %c0_141] : memref<1x8x128xf32, #tpu.memory_space<vmem>>, vector<1x8x128xf32>
    %408 = vector.shape_cast %407 : vector<1x8x128xf32> to vector<8x128xf32>
    %409 = vector.shape_cast %405 : vector<8x128xf32> to vector<1x8x128xf32>
    tpu.vector_store %arg7[%c0_139, %c0_140, %c0_141], %409 {strides = array<i32>} : memref<1x8x128xf32, #tpu.memory_space<vmem>>, vector<1x8x128xf32>,
    %c0_142 = arith.constant 0 : index
    %c0_143 = arith.constant 0 : index
    %c0_144 = arith.constant 0 : index
    %410 = vector.load %arg8[%c0_142, %c0_143, %c0_144] : memref<1x8x128xf32, #tpu.memory_space<vmem>>, vector<1x8x128xf32>
    %411 = vector.shape_cast %410 : vector<1x8x128xf32> to vector<8x128xf32>
    %412 = vector.shape_cast %406 : vector<8x128xf32> to vector<1x8x128xf32>
    tpu.vector_store %arg8[%c0_142, %c0_143, %c0_144], %412 {strides = array<i32>} : memref<1x8x128xf32, #tpu.memory_space<vmem>>, vector<1x8x128xf32>,
    return
  }
  func.func @transform_0(%arg0: i32, %arg1: i32) -> (i32, i32) {
    %c0_i32 = arith.constant 0 : i32
    %c0_i32_0 = arith.constant 0 : i32
    return %arg0, %c0_i32 : i32, i32
  }
  func.func @transform_1(%arg0: i32, %arg1: i32) -> (i32, i32, i32) {
    %c0_i32 = arith.constant 0 : i32
    %c0_i32_0 = arith.constant 0 : i32
    return %arg0, %arg1, %c0_i32 : i32, i32, i32
  }
  func.func @transform_2(%arg0: i32, %arg1: i32) -> (i32, i32) {
    %c0_i32 = arith.constant 0 : i32
    %c0_i32_0 = arith.constant 0 : i32
    %c0_i32_1 = arith.constant 0 : i32
    return %c0_i32, %c0_i32_0 : i32, i32
  }
  func.func @transform_3(%arg0: i32, %arg1: i32) -> (i32, i32) {
    %c0_i32 = arith.constant 0 : i32
    %c0_i32_0 = arith.constant 0 : i32
    %c0_i32_1 = arith.constant 0 : i32
    return %c0_i32, %c0_i32_0 : i32, i32
  }
  func.func @transform_4(%arg0: i32, %arg1: i32) -> (i32, i32, i32) {
    %c0_i32 = arith.constant 0 : i32
    %c0_i32_0 = arith.constant 0 : i32
    return %arg1, %arg0, %c0_i32 : i32, i32, i32
  }
  func.func @transform_5(%arg0: i32, %arg1: i32) -> (i32, i32, i32) {
    %c0_i32 = arith.constant 0 : i32
    %c0_i32_0 = arith.constant 0 : i32
    %c0_i32_1 = arith.constant 0 : i32
    return %c0_i32, %arg0, %c0_i32_0 : i32, i32, i32
  }
  func.func @transform_6(%arg0: i32, %arg1: i32) -> (i32, i32, i32) {
    %c0_i32 = arith.constant 0 : i32
    %c0_i32_0 = arith.constant 0 : i32
    %c0_i32_1 = arith.constant 0 : i32
    return %c0_i32, %arg0, %c0_i32_0 : i32, i32, i32
  }
}

</mosaic_0001>

<llo_original>
// kernel: rnn_encoder_forward.1
$region0: #{rnn_encoder_forward.1}
  #allocation0 [shape = 'u32[]', space=smem, size = 0x4, offset = 0x4, fixed_abs, tag = 'smem constant byte address 0x4 - core index']
  #allocation1 [shape = 'u32[144,128]{1,0:T(1,128)}', space=vmem, size = 0x12000, scoped, tag = 'internal scratch']
  #allocation2 [shape = 'f32[64,512]{1,0:T(8,128)}', space=vmem, size = 0x20000, scoped, tag = 'scratch operand']
  %s0 = inlined_call_operand.vmem [shape: s32[8,128], index: 0, kind: input, shape index: {}]
  %s1 = inlined_call_operand.vmem [shape: bf16[1,64,128], index: 1, kind: input, shape index: {}]
  %s2 = inlined_call_operand.vmem [shape: bf16[128,512], index: 2, kind: input, shape index: {}]
  %s3 = inlined_call_operand.vmem [shape: bf16[128,512], index: 3, kind: input, shape index: {}]
  %s4 = inlined_call_operand.vmem [shape: f32[8,8,128], index: 4, kind: output, shape index: {0}]
  %s5 = inlined_call_operand.vmem [shape: f32[1,8,128], index: 5, kind: output, shape index: {1}]
  %s6 = inlined_call_operand.vmem [shape: f32[1,8,128], index: 6, kind: output, shape index: {2}]
  %7 = xla_tuple %s4, %s5, %s6
  %s8 = sld [smem:[#allocation0]]
  $region46: #{rnn_encoder_forward.1} parent=0
    _
  %s10 = ssub.s32 1, %s8
  %s11 = scalar_select 0, %s10, %s8
  // Predicated region
  $region2: #{rnn_encoder_forward.1} parent=0 // pred_check
    _
  $region3: #{rnn_encoder_forward.1} parent=0 // pred_check_branch
    %13 = sbr.rel (0) target = $region5
  $region4: #{rnn_encoder_forward.1} parent=0 // pred_region
    _
  $region5: #{rnn_encoder_forward.1} parent=0 // pred_fallthru
    _
  // Predicated region
  $region6: #{rnn_encoder_forward.1} parent=0 // pred_check
    _
  $region7: #{rnn_encoder_forward.1} parent=0 // pred_check_branch
    %15 = sbr.rel (0) target = $region9
  $region8: #{rnn_encoder_forward.1} parent=0 // pred_region
    _
  $region9: #{rnn_encoder_forward.1} parent=0 // pred_fallthru
    _
  // Predicated region
  $region10: #{rnn_encoder_forward.1} parent=0 // pred_check
    _
  $region11: #{rnn_encoder_forward.1} parent=0 // pred_check_branch
    %17 = sbr.rel (0) target = $region13
  $region12: #{rnn_encoder_forward.1} parent=0 // pred_region
    _
  $region13: #{rnn_encoder_forward.1} parent=0 // pred_fallthru
    _
  // Predicated region
  $region14: #{rnn_encoder_forward.1} parent=0 // pred_check
    _
  $region15: #{rnn_encoder_forward.1} parent=0 // pred_check_branch
    %19 = sbr.rel (0) target = $region17
  $region16: #{rnn_encoder_forward.1} parent=0 // pred_region
    _
  $region17: #{rnn_encoder_forward.1} parent=0 // pred_fallthru
    _
  %p21 = scmp.eq.s32.totalorder 0, 0
  // Predicated region
  $region18: #{rnn_encoder_forward.1} parent=0 // pred_check
    %p22 = pneg %p21
  $region19: #{rnn_encoder_forward.1} parent=0 // pred_check_branch
    %24 = sbr.rel (%p22) target = $region21
  $region20: #{rnn_encoder_forward.1} parent=0 // pred_region
    %25 = vst [vmem:[%s5] sm:$0xff] 0.0
    %26 = vst [vmem:[%s6] sm:$0xff] 0.0
  $region21: #{rnn_encoder_forward.1} parent=0 // pred_fallthru
    _
  %v27 = vld [vmem:[%s1] sm:$0xf]
  %v28 = vld [vmem:[%s1 + $0x4] sm:$0xf]
  %v29 = vld [vmem:[%s1 + $0x8] sm:$0xf]
  %v30 = vld [vmem:[%s1 + $0xc] sm:$0xf]
  %v31 = vld [vmem:[%s1 + $0x10] sm:$0xf]
  %v32 = vld [vmem:[%s1 + $0x14] sm:$0xf]
  %v33 = vld [vmem:[%s1 + $0x18] sm:$0xf]
  %v34 = vld [vmem:[%s1 + $0x1c] sm:$0xf]
  %v35 = vld [vmem:[%s2] sm:$0xff]
  %v36 = vld [vmem:[%s2 + $0x8] sm:$0xff]
  %v37 = vld [vmem:[%s2 + $0x10] sm:$0xff]
  %v38 = vld [vmem:[%s2 + $0x18] sm:$0xff]
  %v39 = vld [vmem:[%s2 + $0x20] sm:$0xff]
  %v40 = vld [vmem:[%s2 + $0x28] sm:$0xff]
  %v41 = vld [vmem:[%s2 + $0x30] sm:$0xff]
  %v42 = vld [vmem:[%s2 + $0x38] sm:$0xff]
  %v43 = vld [vmem:[%s2 + $0x40] sm:$0xff]
  %v44 = vld [vmem:[%s2 + $0x48] sm:$0xff]
  %v45 = vld [vmem:[%s2 + $0x50] sm:$0xff]
  %v46 = vld [vmem:[%s2 + $0x58] sm:$0xff]
  %v47 = vld [vmem:[%s2 + $0x60] sm:$0xff]
  %v48 = vld [vmem:[%s2 + $0x68] sm:$0xff]
  %v49 = vld [vmem:[%s2 + $0x70] sm:$0xff]
  %v50 = vld [vmem:[%s2 + $0x78] sm:$0xff]
  %v51 = vld [vmem:[%s2 + $0x80] sm:$0xff]
  %v52 = vld [vmem:[%s2 + $0x88] sm:$0xff]
  %v53 = vld [vmem:[%s2 + $0x90] sm:$0xff]
  %v54 = vld [vmem:[%s2 + $0x98] sm:$0xff]
  %v55 = vld [vmem:[%s2 + $0xa0] sm:$0xff]
  %v56 = vld [vmem:[%s2 + $0xa8] sm:$0xff]
  %v57 = vld [vmem:[%s2 + $0xb0] sm:$0xff]
  %v58 = vld [vmem:[%s2 + $0xb8] sm:$0xff]
  %v59 = vld [vmem:[%s2 + $0xc0] sm:$0xff]
  %v60 = vld [vmem:[%s2 + $0xc8] sm:$0xff]
  %v61 = vld [vmem:[%s2 + $0xd0] sm:$0xff]
  %v62 = vld [vmem:[%s2 + $0xd8] sm:$0xff]
  %v63 = vld [vmem:[%s2 + $0xe0] sm:$0xff]
  %v64 = vld [vmem:[%s2 + $0xe8] sm:$0xff]
  %v65 = vld [vmem:[%s2 + $0xf0] sm:$0xff]
  %v66 = vld [vmem:[%s2 + $0xf8] sm:$0xff]
  %v75 = vunpack.c.l.b16 %v27
  %v76 = vunpack.c.l.b16 %v28
  %v77 = vunpack.c.l.b16 %v29
  %v78 = vunpack.c.l.b16 %v30
  %v79 = vunpack.c.l.b16 %v31
  %v80 = vunpack.c.l.b16 %v32
  %v81 = vunpack.c.l.b16 %v33
  %v82 = vunpack.c.l.b16 %v34
  %v83 = vpack.c.b16 %v76, %v75
  %v84 = vpack.c.b16 %v78, %v77
  %v85 = vpack.c.b16 %v80, %v79
  %v86 = vpack.c.b16 %v82, %v81
  %v123 = vunpack.c.l.b16 %v35
  %v124 = vunpack.c.h.b16 %v35
  %v125 = vunpack.c.l.b16 %v36
  %v126 = vunpack.c.h.b16 %v36
  %v127 = vunpack.c.l.b16 %v37
  %v128 = vunpack.c.h.b16 %v37
  %v129 = vunpack.c.l.b16 %v38
  %v130 = vunpack.c.h.b16 %v38
  %v131 = vunpack.c.l.b16 %v39
  %v132 = vunpack.c.h.b16 %v39
  %v133 = vunpack.c.l.b16 %v40
  %v134 = vunpack.c.h.b16 %v40
  %v135 = vunpack.c.l.b16 %v41
  %v136 = vunpack.c.h.b16 %v41
  %v137 = vunpack.c.l.b16 %v42
  %v138 = vunpack.c.h.b16 %v42
  %v139 = vunpack.c.l.b16 %v43
  %v140 = vunpack.c.h.b16 %v43
  %v141 = vunpack.c.l.b16 %v44
  %v142 = vunpack.c.h.b16 %v44
  %v143 = vunpack.c.l.b16 %v45
  %v144 = vunpack.c.h.b16 %v45
  %v145 = vunpack.c.l.b16 %v46
  %v146 = vunpack.c.h.b16 %v46
  %v147 = vunpack.c.l.b16 %v47
  %v148 = vunpack.c.h.b16 %v47
  %v149 = vunpack.c.l.b16 %v48
  %v150 = vunpack.c.h.b16 %v48
  %v151 = vunpack.c.l.b16 %v49
  %v152 = vunpack.c.h.b16 %v49
  %v153 = vunpack.c.l.b16 %v50
  %v154 = vunpack.c.h.b16 %v50
  %v155 = vunpack.c.l.b16 %v51
  %v156 = vunpack.c.h.b16 %v51
  %v157 = vunpack.c.l.b16 %v52
  %v158 = vunpack.c.h.b16 %v52
  %v159 = vunpack.c.l.b16 %v53
  %v160 = vunpack.c.h.b16 %v53
  %v161 = vunpack.c.l.b16 %v54
  %v162 = vunpack.c.h.b16 %v54
  %v163 = vunpack.c.l.b16 %v55
  %v164 = vunpack.c.h.b16 %v55
  %v165 = vunpack.c.l.b16 %v56
  %v166 = vunpack.c.h.b16 %v56
  %v167 = vunpack.c.l.b16 %v57
  %v168 = vunpack.c.h.b16 %v57
  %v169 = vunpack.c.l.b16 %v58
  %v170 = vunpack.c.h.b16 %v58
  %v171 = vunpack.c.l.b16 %v59
  %v172 = vunpack.c.h.b16 %v59
  %v173 = vunpack.c.l.b16 %v60
  %v174 = vunpack.c.h.b16 %v60
  %v175 = vunpack.c.l.b16 %v61
  %v176 = vunpack.c.h.b16 %v61
  %v177 = vunpack.c.l.b16 %v62
  %v178 = vunpack.c.h.b16 %v62
  %v179 = vunpack.c.l.b16 %v63
  %v180 = vunpack.c.h.b16 %v63
  %v181 = vunpack.c.l.b16 %v64
  %v182 = vunpack.c.h.b16 %v64
  %v183 = vunpack.c.l.b16 %v65
  %v184 = vunpack.c.h.b16 %v65
  %v185 = vunpack.c.l.b16 %v66
  %v186 = vunpack.c.h.b16 %v66
  %v187 = vpack.c.b16 %v127, %v123
  %v188 = vpack.c.b16 %v128, %v124
  %v189 = vpack.c.b16 %v129, %v125
  %v190 = vpack.c.b16 %v130, %v126
  %v191 = vpack.c.b16 %v135, %v131
  %v192 = vpack.c.b16 %v136, %v132
  %v193 = vpack.c.b16 %v137, %v133
  %v194 = vpack.c.b16 %v138, %v134
  %v195 = vpack.c.b16 %v143, %v139
  %v196 = vpack.c.b16 %v144, %v140
  %v197 = vpack.c.b16 %v145, %v141
  %v198 = vpack.c.b16 %v146, %v142
  %v199 = vpack.c.b16 %v151, %v147
  %v200 = vpack.c.b16 %v152, %v148
  %v201 = vpack.c.b16 %v153, %v149
  %v202 = vpack.c.b16 %v154, %v150
  %v203 = vpack.c.b16 %v159, %v155
  %v204 = vpack.c.b16 %v160, %v156
  %v205 = vpack.c.b16 %v161, %v157
  %v206 = vpack.c.b16 %v162, %v158
  %v207 = vpack.c.b16 %v167, %v163
  %v208 = vpack.c.b16 %v168, %v164
  %v209 = vpack.c.b16 %v169, %v165
  %v210 = vpack.c.b16 %v170, %v166
  %v211 = vpack.c.b16 %v175, %v171
  %v212 = vpack.c.b16 %v176, %v172
  %v213 = vpack.c.b16 %v177, %v173
  %v214 = vpack.c.b16 %v178, %v174
  %v215 = vpack.c.b16 %v183, %v179
  %v216 = vpack.c.b16 %v184, %v180
  %v217 = vpack.c.b16 %v185, %v181
  %v218 = vpack.c.b16 %v186, %v182
  %251 = vmatprep.subr.bf16.mxu0 %v188
  %252 = vmatpush1.bf16.msra.mxu0 %v187
  %253 = vmatprep.subr.bf16.mxu0 %v192
  %254 = vmatpush1.bf16.msra.mxu0 %v191
  %255 = vmatprep.subr.bf16.mxu0 %v196
  %256 = vmatpush1.bf16.msra.mxu0 %v195
  %257 = vmatprep.subr.bf16.mxu0 %v200
  %258 = vmatpush1.bf16.msra.mxu0 %v199
  %259 = vmatprep.subr.bf16.mxu0 %v204
  %260 = vmatpush1.bf16.msra.mxu0 %v203
  %261 = vmatprep.subr.bf16.mxu0 %v208
  %262 = vmatpush1.bf16.msra.mxu0 %v207
  %263 = vmatprep.subr.bf16.mxu0 %v212
  %264 = vmatpush1.bf16.msra.mxu0 %v211
  %265 = vmatprep.subr.bf16.mxu0 %v216
  %266 = vmatpush1.bf16.msra.mxu0 %v215
  %267 = vmatprep.subr.bf16.mxu0 0
  %268 = vmatpush1.bf16.msra.mxu0 0
  %269 = vmatprep.subr.bf16.mxu0 0
  %270 = vmatpush1.bf16.msra.mxu0 0
  %271 = vmatprep.subr.bf16.mxu0 0
  %272 = vmatpush1.bf16.msra.mxu0 0
  %273 = vmatprep.subr.bf16.mxu0 0
  %274 = vmatpush1.bf16.msra.mxu0 0
  %275 = vmatprep.subr.bf16.mxu0 0
  %276 = vmatpush1.bf16.msra.mxu0 0
  %277 = vmatprep.subr.bf16.mxu0 0
  %278 = vmatpush1.bf16.msra.mxu0 0
  %279 = vmatprep.subr.bf16.mxu0 0
  %280 = vmatpush1.bf16.msra.mxu0 0
  %281 = vmatprep.subr.bf16.mxu0 0
  %282 = vmatpush1.bf16.msra.mxu0 0
  %283 = vmatprep.mubr.bf16.mxu0 0
  %284 = vmatmul.mubr.bf16.gmra.mrb[0].mxu0 %v83
  %v285 = vpop.f32.mrb[0].mxu0
  %v286 = vadd.f32 0.0, %v285
  %v287 = vpop.f32.mrb[0].mxu0
  %v288 = vadd.f32 0.0, %v287
  %v289 = vpop.f32.mrb[0].mxu0
  %v290 = vadd.f32 0.0, %v289
  %v291 = vpop.f32.mrb[0].mxu0
  %v292 = vadd.f32 0.0, %v291
  %293 = vmatprep.mubr.bf16.mxu0 0
  %294 = vmatmul.mubr.bf16.gmra.mrb[0].mxu0 %v84
  %v295 = vpop.f32.mrb[0].mxu0
  %v296 = vadd.f32 0.0, %v295
  %v297 = vpop.f32.mrb[0].mxu0
  %v298 = vadd.f32 0.0, %v297
  %v299 = vpop.f32.mrb[0].mxu0
  %v300 = vadd.f32 0.0, %v299
  %v301 = vpop.f32.mrb[0].mxu0
  %v302 = vadd.f32 0.0, %v301
  %303 = vmatprep.mubr.bf16.mxu0 0
  %304 = vmatmul.mubr.bf16.gmra.mrb[0].mxu0 %v85
  %v305 = vpop.f32.mrb[0].mxu0
  %v306 = vadd.f32 0.0, %v305
  %v307 = vpop.f32.mrb[0].mxu0
  %v308 = vadd.f32 0.0, %v307
  %v309 = vpop.f32.mrb[0].mxu0
  %v310 = vadd.f32 0.0, %v309
  %v311 = vpop.f32.mrb[0].mxu0
  %v312 = vadd.f32 0.0, %v311
  %313 = vmatprep.mubr.bf16.mxu0 0
  %314 = vmatmul.mubr.bf16.gmra.mrb[0].mxu0 %v86
  %v315 = vpop.f32.mrb[0].mxu0
  %v316 = vadd.f32 0.0, %v315
  %v317 = vpop.f32.mrb[0].mxu0
  %v318 = vadd.f32 0.0, %v317
  %v319 = vpop.f32.mrb[0].mxu0
  %v320 = vadd.f32 0.0, %v319
  %v321 = vpop.f32.mrb[0].mxu0
  %v322 = vadd.f32 0.0, %v321
  %323 = vdwg.mxu0
  %324 = vmatprep.subr.bf16.mxu0 %v190
  %325 = vmatpush1.bf16.msra.mxu0 %v189
  %326 = vmatprep.subr.bf16.mxu0 %v194
  %327 = vmatpush1.bf16.msra.mxu0 %v193
  %328 = vmatprep.subr.bf16.mxu0 %v198
  %329 = vmatpush1.bf16.msra.mxu0 %v197
  %330 = vmatprep.subr.bf16.mxu0 %v202
  %331 = vmatpush1.bf16.msra.mxu0 %v201
  %332 = vmatprep.subr.bf16.mxu0 %v206
  %333 = vmatpush1.bf16.msra.mxu0 %v205
  %334 = vmatprep.subr.bf16.mxu0 %v210
  %335 = vmatpush1.bf16.msra.mxu0 %v209
  %336 = vmatprep.subr.bf16.mxu0 %v214
  %337 = vmatpush1.bf16.msra.mxu0 %v213
  %338 = vmatprep.subr.bf16.mxu0 %v218
  %339 = vmatpush1.bf16.msra.mxu0 %v217
  %340 = vmatprep.subr.bf16.mxu0 0
  %341 = vmatpush1.bf16.msra.mxu0 0
  %342 = vmatprep.subr.bf16.mxu0 0
  %343 = vmatpush1.bf16.msra.mxu0 0
  %344 = vmatprep.subr.bf16.mxu0 0
  %345 = vmatpush1.bf16.msra.mxu0 0
  %346 = vmatprep.subr.bf16.mxu0 0
  %347 = vmatpush1.bf16.msra.mxu0 0
  %348 = vmatprep.subr.bf16.mxu0 0
  %349 = vmatpush1.bf16.msra.mxu0 0
  %350 = vmatprep.subr.bf16.mxu0 0
  %351 = vmatpush1.bf16.msra.mxu0 0
  %352 = vmatprep.subr.bf16.mxu0 0
  %353 = vmatpush1.bf16.msra.mxu0 0
  %354 = vmatprep.subr.bf16.mxu0 0
  %355 = vmatpush1.bf16.msra.mxu0 0
  %356 = vmatprep.mubr.bf16.mxu0 0
  %357 = vmatmul.mubr.bf16.gmra.mrb[0].mxu0 %v83
  %v358 = vpop.f32.mrb[0].mxu0
  %v359 = vadd.f32 0.0, %v358
  %v360 = vpop.f32.mrb[0].mxu0
  %v361 = vadd.f32 0.0, %v360
  %v362 = vpop.f32.mrb[0].mxu0
  %v363 = vadd.f32 0.0, %v362
  %v364 = vpop.f32.mrb[0].mxu0
  %v365 = vadd.f32 0.0, %v364
  %366 = vmatprep.mubr.bf16.mxu0 0
  %367 = vmatmul.mubr.bf16.gmra.mrb[0].mxu0 %v84
  %v368 = vpop.f32.mrb[0].mxu0
  %v369 = vadd.f32 0.0, %v368
  %v370 = vpop.f32.mrb[0].mxu0
  %v371 = vadd.f32 0.0, %v370
  %v372 = vpop.f32.mrb[0].mxu0
  %v373 = vadd.f32 0.0, %v372
  %v374 = vpop.f32.mrb[0].mxu0
  %v375 = vadd.f32 0.0, %v374
  %376 = vmatprep.mubr.bf16.mxu0 0
  %377 = vmatmul.mubr.bf16.gmra.mrb[0].mxu0 %v85
  %v378 = vpop.f32.mrb[0].mxu0
  %v379 = vadd.f32 0.0, %v378
  %v380 = vpop.f32.mrb[0].mxu0
  %v381 = vadd.f32 0.0, %v380
  %v382 = vpop.f32.mrb[0].mxu0
  %v383 = vadd.f32 0.0, %v382
  %v384 = vpop.f32.mrb[0].mxu0
  %v385 = vadd.f32 0.0, %v384
  %386 = vmatprep.mubr.bf16.mxu0 0
  %387 = vmatmul.mubr.bf16.gmra.mrb[0].mxu0 %v86
  %v388 = vpop.f32.mrb[0].mxu0
  %v389 = vadd.f32 0.0, %v388
  %v390 = vpop.f32.mrb[0].mxu0
  %v391 = vadd.f32 0.0, %v390
  %v392 = vpop.f32.mrb[0].mxu0
  %v393 = vadd.f32 0.0, %v392
  %v394 = vpop.f32.mrb[0].mxu0
  %v395 = vadd.f32 0.0, %v394
  %396 = vdwg.mxu0
  %397 = vst [vmem:[#allocation2] sm:$0xff] %v286
  %398 = vst [vmem:[#allocation2 + $0x8] sm:$0xff] %v288
  %399 = vst [vmem:[#allocation2 + $0x10] sm:$0xff] %v359
  %400 = vst [vmem:[#allocation2 + $0x18] sm:$0xff] %v361
  %401 = vst [vmem:[#allocation2 + $0x20] sm:$0xff] %v290
  %402 = vst [vmem:[#allocation2 + $0x28] sm:$0xff] %v292
  %403 = vst [vmem:[#allocation2 + $0x30] sm:$0xff] %v363
  %404 = vst [vmem:[#allocation2 + $0x38] sm:$0xff] %v365
  %405 = vst [vmem:[#allocation2 + $0x40] sm:$0xff] %v296
  %406 = vst [vmem:[#allocation2 + $0x48] sm:$0xff] %v298
  %407 = vst [vmem:[#allocation2 + $0x50] sm:$0xff] %v369
  %408 = vst [vmem:[#allocation2 + $0x58] sm:$0xff] %v371
  %409 = vst [vmem:[#allocation2 + $0x60] sm:$0xff] %v300
  %410 = vst [vmem:[#allocation2 + $0x68] sm:$0xff] %v302
  %411 = vst [vmem:[#allocation2 + $0x70] sm:$0xff] %v373
  %412 = vst [vmem:[#allocation2 + $0x78] sm:$0xff] %v375
  %413 = vst [vmem:[#allocation2 + $0x80] sm:$0xff] %v306
  %414 = vst [vmem:[#allocation2 + $0x88] sm:$0xff] %v308
  %415 = vst [vmem:[#allocation2 + $0x90] sm:$0xff] %v379
  %416 = vst [vmem:[#allocation2 + $0x98] sm:$0xff] %v381
  %417 = vst [vmem:[#allocation2 + $0xa0] sm:$0xff] %v310
  %418 = vst [vmem:[#allocation2 + $0xa8] sm:$0xff] %v312
  %419 = vst [vmem:[#allocation2 + $0xb0] sm:$0xff] %v383
  %420 = vst [vmem:[#allocation2 + $0xb8] sm:$0xff] %v385
  %421 = vst [vmem:[#allocation2 + $0xc0] sm:$0xff] %v316
  %422 = vst [vmem:[#allocation2 + $0xc8] sm:$0xff] %v318
  %423 = vst [vmem:[#allocation2 + $0xd0] sm:$0xff] %v389
  %424 = vst [vmem:[#allocation2 + $0xd8] sm:$0xff] %v391
  %425 = vst [vmem:[#allocation2 + $0xe0] sm:$0xff] %v320
  %426 = vst [vmem:[#allocation2 + $0xe8] sm:$0xff] %v322
  %427 = vst [vmem:[#allocation2 + $0xf0] sm:$0xff] %v393
  %428 = vst [vmem:[#allocation2 + $0xf8] sm:$0xff] %v395
  %v429 = vld [vmem:[%s3] sm:$0xff]
  %v430 = vld [vmem:[%s3 + $0x8] sm:$0xff]
  %v431 = vld [vmem:[%s3 + $0x10] sm:$0xff]
  %v432 = vld [vmem:[%s3 + $0x18] sm:$0xff]
  %v433 = vld [vmem:[%s3 + $0x20] sm:$0xff]
  %v434 = vld [vmem:[%s3 + $0x28] sm:$0xff]
  %v435 = vld [vmem:[%s3 + $0x30] sm:$0xff]
  %v436 = vld [vmem:[%s3 + $0x38] sm:$0xff]
  %v437 = vld [vmem:[%s3 + $0x40] sm:$0xff]
  %v438 = vld [vmem:[%s3 + $0x48] sm:$0xff]
  %v439 = vld [vmem:[%s3 + $0x50] sm:$0xff]
  %v440 = vld [vmem:[%s3 + $0x58] sm:$0xff]
  %v441 = vld [vmem:[%s3 + $0x60] sm:$0xff]
  %v442 = vld [vmem:[%s3 + $0x68] sm:$0xff]
  %v443 = vld [vmem:[%s3 + $0x70] sm:$0xff]
  %v444 = vld [vmem:[%s3 + $0x78] sm:$0xff]
  %v445 = vld [vmem:[%s3 + $0x80] sm:$0xff]
  %v446 = vld [vmem:[%s3 + $0x88] sm:$0xff]
  %v447 = vld [vmem:[%s3 + $0x90] sm:$0xff]
  %v448 = vld [vmem:[%s3 + $0x98] sm:$0xff]
  %v449 = vld [vmem:[%s3 + $0xa0] sm:$0xff]
  %v450 = vld [vmem:[%s3 + $0xa8] sm:$0xff]
  %v451 = vld [vmem:[%s3 + $0xb0] sm:$0xff]
  %v452 = vld [vmem:[%s3 + $0xb8] sm:$0xff]
  %v453 = vld [vmem:[%s3 + $0xc0] sm:$0xff]
  %v454 = vld [vmem:[%s3 + $0xc8] sm:$0xff]
  %v455 = vld [vmem:[%s3 + $0xd0] sm:$0xff]
  %v456 = vld [vmem:[%s3 + $0xd8] sm:$0xff]
  %v457 = vld [vmem:[%s3 + $0xe0] sm:$0xff]
  %v458 = vld [vmem:[%s3 + $0xe8] sm:$0xff]
  %v459 = vld [vmem:[%s3 + $0xf0] sm:$0xff]
  %v460 = vld [vmem:[%s3 + $0xf8] sm:$0xff]
  %v461 = vld [vmem:[%s0] sm:$0xff]
  %s462 = smul.u32 0, 8
  %v463 = vld [vmem:[%s5] sm:$0xff]
  %v464 = vld [vmem:[%s6] sm:$0xff]
  %s465 = smul.u32 0, 4
  %s466 = smul.addr %s465, 8
  %s467 = scalar_lea.vmem [#allocation2], %s466
  %v468 = vld [vmem:[%s467] sm:$0xff]
  %v469 = vld [vmem:[%s467 + $0x8] sm:$0xff]
  %v470 = vld [vmem:[%s467 + $0x10] sm:$0xff]
  %v471 = vld [vmem:[%s467 + $0x18] sm:$0xff]
  %v472 = vpack.c.bf16 %v463, %v463
  %v505 = vunpack.c.l.b16 %v429
  %v506 = vunpack.c.h.b16 %v429
  %v507 = vunpack.c.l.b16 %v430
  %v508 = vunpack.c.h.b16 %v430
  %v509 = vunpack.c.l.b16 %v431
  %v510 = vunpack.c.h.b16 %v431
  %v511 = vunpack.c.l.b16 %v432
  %v512 = vunpack.c.h.b16 %v432
  %v513 = vunpack.c.l.b16 %v433
  %v514 = vunpack.c.h.b16 %v433
  %v515 = vunpack.c.l.b16 %v434
  %v516 = vunpack.c.h.b16 %v434
  %v517 = vunpack.c.l.b16 %v435
  %v518 = vunpack.c.h.b16 %v435
  %v519 = vunpack.c.l.b16 %v436
  %v520 = vunpack.c.h.b16 %v436
  %v521 = vunpack.c.l.b16 %v437
  %v522 = vunpack.c.h.b16 %v437
  %v523 = vunpack.c.l.b16 %v438
  %v524 = vunpack.c.h.b16 %v438
  %v525 = vunpack.c.l.b16 %v439
  %v526 = vunpack.c.h.b16 %v439
  %v527 = vunpack.c.l.b16 %v440
  %v528 = vunpack.c.h.b16 %v440
  %v529 = vunpack.c.l.b16 %v441
  %v530 = vunpack.c.h.b16 %v441
  %v531 = vunpack.c.l.b16 %v442
  %v532 = vunpack.c.h.b16 %v442
  %v533 = vunpack.c.l.b16 %v443
  %v534 = vunpack.c.h.b16 %v443
  %v535 = vunpack.c.l.b16 %v444
  %v536 = vunpack.c.h.b16 %v444
  %v537 = vunpack.c.l.b16 %v445
  %v538 = vunpack.c.h.b16 %v445
  %v539 = vunpack.c.l.b16 %v446
  %v540 = vunpack.c.h.b16 %v446
  %v541 = vunpack.c.l.b16 %v447
  %v542 = vunpack.c.h.b16 %v447
  %v543 = vunpack.c.l.b16 %v448
  %v544 = vunpack.c.h.b16 %v448
  %v545 = vunpack.c.l.b16 %v449
  %v546 = vunpack.c.h.b16 %v449
  %v547 = vunpack.c.l.b16 %v450
  %v548 = vunpack.c.h.b16 %v450
  %v549 = vunpack.c.l.b16 %v451
  %v550 = vunpack.c.h.b16 %v451
  %v551 = vunpack.c.l.b16 %v452
  %v552 = vunpack.c.h.b16 %v452
  %v553 = vunpack.c.l.b16 %v453
  %v554 = vunpack.c.h.b16 %v453
  %v555 = vunpack.c.l.b16 %v454
  %v556 = vunpack.c.h.b16 %v454
  %v557 = vunpack.c.l.b16 %v455
  %v558 = vunpack.c.h.b16 %v455
  %v559 = vunpack.c.l.b16 %v456
  %v560 = vunpack.c.h.b16 %v456
  %v561 = vunpack.c.l.b16 %v457
  %v562 = vunpack.c.h.b16 %v457
  %v563 = vunpack.c.l.b16 %v458
  %v564 = vunpack.c.h.b16 %v458
  %v565 = vunpack.c.l.b16 %v459
  %v566 = vunpack.c.h.b16 %v459
  %v567 = vunpack.c.l.b16 %v460
  %v568 = vunpack.c.h.b16 %v460
  %v569 = vpack.c.b16 %v509, %v505
  %v570 = vpack.c.b16 %v510, %v506
  %v571 = vpack.c.b16 %v511, %v507
  %v572 = vpack.c.b16 %v512, %v508
  %v573 = vpack.c.b16 %v517, %v513
  %v574 = vpack.c.b16 %v518, %v514
  %v575 = vpack.c.b16 %v519, %v515
  %v576 = vpack.c.b16 %v520, %v516
  %v577 = vpack.c.b16 %v525, %v521
  %v578 = vpack.c.b16 %v526, %v522
  %v579 = vpack.c.b16 %v527, %v523
  %v580 = vpack.c.b16 %v528, %v524
  %v581 = vpack.c.b16 %v533, %v529
  %v582 = vpack.c.b16 %v534, %v530
  %v583 = vpack.c.b16 %v535, %v531
  %v584 = vpack.c.b16 %v536, %v532
  %v585 = vpack.c.b16 %v541, %v537
  %v586 = vpack.c.b16 %v542, %v538
  %v587 = vpack.c.b16 %v543, %v539
  %v588 = vpack.c.b16 %v544, %v540
  %v589 = vpack.c.b16 %v549, %v545
  %v590 = vpack.c.b16 %v550, %v546
  %v591 = vpack.c.b16 %v551, %v547
  %v592 = vpack.c.b16 %v552, %v548
  %v593 = vpack.c.b16 %v557, %v553
  %v594 = vpack.c.b16 %v558, %v554
  %v595 = vpack.c.b16 %v559, %v555
  %v596 = vpack.c.b16 %v560, %v556
  %v597 = vpack.c.b16 %v565, %v561
  %v598 = vpack.c.b16 %v566, %v562
  %v599 = vpack.c.b16 %v567, %v563
  %v600 = vpack.c.b16 %v568, %v564
  %633 = vmatprep.subr.bf16.mxu0 %v570
  %634 = vmatpush1.bf16.msra.mxu0 %v569
  %635 = vmatprep.subr.bf16.mxu0 %v574
  %636 = vmatpush1.bf16.msra.mxu0 %v573
  %637 = vmatprep.subr.bf16.mxu0 %v578
  %638 = vmatpush1.bf16.msra.mxu0 %v577
  %639 = vmatprep.subr.bf16.mxu0 %v582
  %640 = vmatpush1.bf16.msra.mxu0 %v581
  %641 = vmatprep.subr.bf16.mxu0 %v586
  %642 = vmatpush1.bf16.msra.mxu0 %v585
  %643 = vmatprep.subr.bf16.mxu0 %v590
  %644 = vmatpush1.bf16.msra.mxu0 %v589
  %645 = vmatprep.subr.bf16.mxu0 %v594
  %646 = vmatpush1.bf16.msra.mxu0 %v593
  %647 = vmatprep.subr.bf16.mxu0 %v598
  %648 = vmatpush1.bf16.msra.mxu0 %v597
  %649 = vmatprep.subr.bf16.mxu0 0
  %650 = vmatpush1.bf16.msra.mxu0 0
  %651 = vmatprep.subr.bf16.mxu0 0
  %652 = vmatpush1.bf16.msra.mxu0 0
  %653 = vmatprep.subr.bf16.mxu0 0
  %654 = vmatpush1.bf16.msra.mxu0 0
  %655 = vmatprep.subr.bf16.mxu0 0
  %656 = vmatpush1.bf16.msra.mxu0 0
  %657 = vmatprep.subr.bf16.mxu0 0
  %658 = vmatpush1.bf16.msra.mxu0 0
  %659 = vmatprep.subr.bf16.mxu0 0
  %660 = vmatpush1.bf16.msra.mxu0 0
  %661 = vmatprep.subr.bf16.mxu0 0
  %662 = vmatpush1.bf16.msra.mxu0 0
  %663 = vmatprep.subr.bf16.mxu0 0
  %664 = vmatpush1.bf16.msra.mxu0 0
  %665 = vmatprep.mubr.bf16.mxu0 0
  %666 = vmatmul.mubr.bf16.gmra.mrb[0].mxu0 %v472
  %v667 = vpop.f32.mrb[0].mxu0
  %v668 = vadd.f32 0.0, %v667
  %v669 = vpop.f32.mrb[0].mxu0
  %v670 = vadd.f32 0.0, %v669
  %v671 = vpop.f32.mrb[0].mxu0
  %v672 = vpop.f32.mrb[0].mxu0
  %673 = vdwg.mxu0
  %674 = vmatprep.subr.bf16.mxu0 %v572
  %675 = vmatpush1.bf16.msra.mxu0 %v571
  %676 = vmatprep.subr.bf16.mxu0 %v576
  %677 = vmatpush1.bf16.msra.mxu0 %v575
  %678 = vmatprep.subr.bf16.mxu0 %v580
  %679 = vmatpush1.bf16.msra.mxu0 %v579
  %680 = vmatprep.subr.bf16.mxu0 %v584
  %681 = vmatpush1.bf16.msra.mxu0 %v583
  %682 = vmatprep.subr.bf16.mxu0 %v588
  %683 = vmatpush1.bf16.msra.mxu0 %v587
  %684 = vmatprep.subr.bf16.mxu0 %v592
  %685 = vmatpush1.bf16.msra.mxu0 %v591
  %686 = vmatprep.subr.bf16.mxu0 %v596
  %687 = vmatpush1.bf16.msra.mxu0 %v595
  %688 = vmatprep.subr.bf16.mxu0 %v600
  %689 = vmatpush1.bf16.msra.mxu0 %v599
  %690 = vmatprep.subr.bf16.mxu0 0
  %691 = vmatpush1.bf16.msra.mxu0 0
  %692 = vmatprep.subr.bf16.mxu0 0
  %693 = vmatpush1.bf16.msra.mxu0 0
  %694 = vmatprep.subr.bf16.mxu0 0
  %695 = vmatpush1.bf16.msra.mxu0 0
  %696 = vmatprep.subr.bf16.mxu0 0
  %697 = vmatpush1.bf16.msra.mxu0 0
  %698 = vmatprep.subr.bf16.mxu0 0
  %699 = vmatpush1.bf16.msra.mxu0 0
  %700 = vmatprep.subr.bf16.mxu0 0
  %701 = vmatpush1.bf16.msra.mxu0 0
  %702 = vmatprep.subr.bf16.mxu0 0
  %703 = vmatpush1.bf16.msra.mxu0 0
  %704 = vmatprep.subr.bf16.mxu0 0
  %705 = vmatpush1.bf16.msra.mxu0 0
  %706 = vmatprep.mubr.bf16.mxu0 0
  %707 = vmatmul.mubr.bf16.gmra.mrb[0].mxu0 %v472
  %v708 = vpop.f32.mrb[0].mxu0
  %v709 = vadd.f32 0.0, %v708
  %v710 = vpop.f32.mrb[0].mxu0
  %v711 = vadd.f32 0.0, %v710
  %v712 = vpop.f32.mrb[0].mxu0
  %v713 = vpop.f32.mrb[0].mxu0
  %714 = vdwg.mxu0
  %v715 = vadd.f32 %v468, %v668
  %v716 = vadd.f32 %v469, %v670
  %v717 = vadd.f32 %v470, %v709
  %v718 = vadd.f32 %v471, %v711
  %v719 = vmul.f32 %v715, 0.5
  %v720 = vtanh.pop %v719
  %v721 = vmul.f32 %v720, 0.5
  %v722 = vadd.f32 %v721, 0.5
  %v723 = vmul.f32 %v716, 0.5
  %v724 = vtanh.pop %v723
  %v725 = vmul.f32 %v724, 0.5
  %v726 = vadd.f32 %v725, 0.5
  %v727 = vtanh.pop %v717
  %v728 = vmul.f32 %v718, 0.5
  %v729 = vtanh.pop %v728
  %v730 = vmul.f32 %v729, 0.5
  %v731 = vadd.f32 %v730, 0.5
  %v732 = vmul.f32 %v726, %v464
  %v733 = vmul.f32 %v722, %v727
  %v734 = vadd.f32 %v732, %v733
  %v735 = vtanh.pop %v734
  %v736 = vmul.f32 %v731, %v735
  %v737 = vstv %s462
  %vm738 = vcmp.lt.s32.totalorder %v737, %v461
  %v739 = vsel %vm738, %v736, 0.0
  %740 = vst [vmem:[%s4] sm:$0xff] %v739
  %v741 = vsel %vm738, %v736, %v463
  %v742 = vsel %vm738, %v734, %v464
  %s743 = smul.u32 1, 4
  %s744 = smul.addr %s743, 8
  %s745 = scalar_lea.vmem [#allocation2], %s744
  %v746 = vld [vmem:[%s745] sm:$0xff]
  %v747 = vld [vmem:[%s745 + $0x8] sm:$0xff]
  %v748 = vld [vmem:[%s745 + $0x10] sm:$0xff]
  %v749 = vld [vmem:[%s745 + $0x18] sm:$0xff]
  %v750 = vpack.c.bf16 %v741, %v741
  %751 = vmatprep.subr.bf16.mxu0 %v570
  %752 = vmatpush1.bf16.msra.mxu0 %v569
  %753 = vmatprep.subr.bf16.mxu0 %v574
  %754 = vmatpush1.bf16.msra.mxu0 %v573
  %755 = vmatprep.subr.bf16.mxu0 %v578
  %756 = vmatpush1.bf16.msra.mxu0 %v577
  %757 = vmatprep.subr.bf16.mxu0 %v582
  %758 = vmatpush1.bf16.msra.mxu0 %v581
  %759 = vmatprep.subr.bf16.mxu0 %v586
  %760 = vmatpush1.bf16.msra.mxu0 %v585
  %761 = vmatprep.subr.bf16.mxu0 %v590
  %762 = vmatpush1.bf16.msra.mxu0 %v589
  %763 = vmatprep.subr.bf16.mxu0 %v594
  %764 = vmatpush1.bf16.msra.mxu0 %v593
  %765 = vmatprep.subr.bf16.mxu0 %v598
  %766 = vmatpush1.bf16.msra.mxu0 %v597
  %767 = vmatprep.subr.bf16.mxu0 0
  %768 = vmatpush1.bf16.msra.mxu0 0
  %769 = vmatprep.subr.bf16.mxu0 0
  %770 = vmatpush1.bf16.msra.mxu0 0
  %771 = vmatprep.subr.bf16.mxu0 0
  %772 = vmatpush1.bf16.msra.mxu0 0
  %773 = vmatprep.subr.bf16.mxu0 0
  %774 = vmatpush1.bf16.msra.mxu0 0
  %775 = vmatprep.subr.bf16.mxu0 0
  %776 = vmatpush1.bf16.msra.mxu0 0
  %777 = vmatprep.subr.bf16.mxu0 0
  %778 = vmatpush1.bf16.msra.mxu0 0
  %779 = vmatprep.subr.bf16.mxu0 0
  %780 = vmatpush1.bf16.msra.mxu0 0
  %781 = vmatprep.subr.bf16.mxu0 0
  %782 = vmatpush1.bf16.msra.mxu0 0
  %783 = vmatprep.mubr.bf16.mxu0 0
  %784 = vmatmul.mubr.bf16.gmra.mrb[0].mxu0 %v750
  %v785 = vpop.f32.mrb[0].mxu0
  %v786 = vadd.f32 0.0, %v785
  %v787 = vpop.f32.mrb[0].mxu0
  %v788 = vadd.f32 0.0, %v787
  %v789 = vpop.f32.mrb[0].mxu0
  %v790 = vpop.f32.mrb[0].mxu0
  %791 = vdwg.mxu0
  %792 = vmatprep.subr.bf16.mxu0 %v572
  %793 = vmatpush1.bf16.msra.mxu0 %v571
  %794 = vmatprep.subr.bf16.mxu0 %v576
  %795 = vmatpush1.bf16.msra.mxu0 %v575
  %796 = vmatprep.subr.bf16.mxu0 %v580
  %797 = vmatpush1.bf16.msra.mxu0 %v579
  %798 = vmatprep.subr.bf16.mxu0 %v584
  %799 = vmatpush1.bf16.msra.mxu0 %v583
  %800 = vmatprep.subr.bf16.mxu0 %v588
  %801 = vmatpush1.bf16.msra.mxu0 %v587
  %802 = vmatprep.subr.bf16.mxu0 %v592
  %803 = vmatpush1.bf16.msra.mxu0 %v591
  %804 = vmatprep.subr.bf16.mxu0 %v596
  %805 = vmatpush1.bf16.msra.mxu0 %v595
  %806 = vmatprep.subr.bf16.mxu0 %v600
  %807 = vmatpush1.bf16.msra.mxu0 %v599
  %808 = vmatprep.subr.bf16.mxu0 0
  %809 = vmatpush1.bf16.msra.mxu0 0
  %810 = vmatprep.subr.bf16.mxu0 0
  %811 = vmatpush1.bf16.msra.mxu0 0
  %812 = vmatprep.subr.bf16.mxu0 0
  %813 = vmatpush1.bf16.msra.mxu0 0
  %814 = vmatprep.subr.bf16.mxu0 0
  %815 = vmatpush1.bf16.msra.mxu0 0
  %816 = vmatprep.subr.bf16.mxu0 0
  %817 = vmatpush1.bf16.msra.mxu0 0
  %818 = vmatprep.subr.bf16.mxu0 0
  %819 = vmatpush1.bf16.msra.mxu0 0
  %820 = vmatprep.subr.bf16.mxu0 0
  %821 = vmatpush1.bf16.msra.mxu0 0
  %822 = vmatprep.subr.bf16.mxu0 0
  %823 = vmatpush1.bf16.msra.mxu0 0
  %824 = vmatprep.mubr.bf16.mxu0 0
  %825 = vmatmul.mubr.bf16.gmra.mrb[0].mxu0 %v750
  %v826 = vpop.f32.mrb[0].mxu0
  %v827 = vadd.f32 0.0, %v826
  %v828 = vpop.f32.mrb[0].mxu0
  %v829 = vadd.f32 0.0, %v828
  %v830 = vpop.f32.mrb[0].mxu0
  %v831 = vpop.f32.mrb[0].mxu0
  %832 = vdwg.mxu0
  %v833 = vadd.f32 %v746, %v786
  %v834 = vadd.f32 %v747, %v788
  %v835 = vadd.f32 %v748, %v827
  %v836 = vadd.f32 %v749, %v829
  %v837 = vmul.f32 %v833, 0.5
  %v838 = vtanh.pop %v837
  %v839 = vmul.f32 %v838, 0.5
  %v840 = vadd.f32 %v839, 0.5
  %v841 = vmul.f32 %v834, 0.5
  %v842 = vtanh.pop %v841
  %v843 = vmul.f32 %v842, 0.5
  %v844 = vadd.f32 %v843, 0.5
  %v845 = vtanh.pop %v835
  %v846 = vmul.f32 %v836, 0.5
  %v847 = vtanh.pop %v846
  %v848 = vmul.f32 %v847, 0.5
  %v849 = vadd.f32 %v848, 0.5
  %v850 = vmul.f32 %v844, %v742
  %v851 = vmul.f32 %v840, %v845
  %v852 = vadd.f32 %v850, %v851
  %v853 = vtanh.pop %v852
  %v854 = vmul.f32 %v849, %v853
  %s855 = sadd.s32 %s462, 1
  %v856 = vstv %s855
  %vm857 = vcmp.lt.s32.totalorder %v856, %v461
  %v858 = vsel %vm857, %v854, 0.0
  %s859 = scalar_lea.vmem %s4, 8
  %860 = vst [vmem:[%s859] sm:$0xff] %v858
  %v861 = vsel %vm857, %v854, %v741
  %v862 = vsel %vm857, %v852, %v742
  %s863 = smul.u32 2, 4
  %s864 = smul.addr %s863, 8
  %s865 = scalar_lea.vmem [#allocation2], %s864
  %v866 = vld [vmem:[%s865] sm:$0xff]
  %v867 = vld [vmem:[%s865 + $0x8] sm:$0xff]
  %v868 = vld [vmem:[%s865 + $0x10] sm:$0xff]
  %v869 = vld [vmem:[%s865 + $0x18] sm:$0xff]
  %v870 = vpack.c.bf16 %v861, %v861
  %871 = vmatprep.subr.bf16.mxu0 %v570
  %872 = vmatpush1.bf16.msra.mxu0 %v569
  %873 = vmatprep.subr.bf16.mxu0 %v574
  %874 = vmatpush1.bf16.msra.mxu0 %v573
  %875 = vmatprep.subr.bf16.mxu0 %v578
  %876 = vmatpush1.bf16.msra.mxu0 %v577
  %877 = vmatprep.subr.bf16.mxu0 %v582
  %878 = vmatpush1.bf16.msra.mxu0 %v581
  %879 = vmatprep.subr.bf16.mxu0 %v586
  %880 = vmatpush1.bf16.msra.mxu0 %v585
  %881 = vmatprep.subr.bf16.mxu0 %v590
  %882 = vmatpush1.bf16.msra.mxu0 %v589
  %883 = vmatprep.subr.bf16.mxu0 %v594
  %884 = vmatpush1.bf16.msra.mxu0 %v593
  %885 = vmatprep.subr.bf16.mxu0 %v598
  %886 = vmatpush1.bf16.msra.mxu0 %v597
  %887 = vmatprep.subr.bf16.mxu0 0
  %888 = vmatpush1.bf16.msra.mxu0 0
  %889 = vmatprep.subr.bf16.mxu0 0
  %890 = vmatpush1.bf16.msra.mxu0 0
  %891 = vmatprep.subr.bf16.mxu0 0
  %892 = vmatpush1.bf16.msra.mxu0 0
  %893 = vmatprep.subr.bf16.mxu0 0
  %894 = vmatpush1.bf16.msra.mxu0 0
  %895 = vmatprep.subr.bf16.mxu0 0
  %896 = vmatpush1.bf16.msra.mxu0 0
  %897 = vmatprep.subr.bf16.mxu0 0
  %898 = vmatpush1.bf16.msra.mxu0 0
  %899 = vmatprep.subr.bf16.mxu0 0
  %900 = vmatpush1.bf16.msra.mxu0 0
  %901 = vmatprep.subr.bf16.mxu0 0
  %902 = vmatpush1.bf16.msra.mxu0 0
  %903 = vmatprep.mubr.bf16.mxu0 0
  %904 = vmatmul.mubr.bf16.gmra.mrb[0].mxu0 %v870
  %v905 = vpop.f32.mrb[0].mxu0
  %v906 = vadd.f32 0.0, %v905
  %v907 = vpop.f32.mrb[0].mxu0
  %v908 = vadd.f32 0.0, %v907
  %v909 = vpop.f32.mrb[0].mxu0
  %v910 = vpop.f32.mrb[0].mxu0
  %911 = vdwg.mxu0
  %912 = vmatprep.subr.bf16.mxu0 %v572
  %913 = vmatpush1.bf16.msra.mxu0 %v571
  %914 = vmatprep.subr.bf16.mxu0 %v576
  %915 = vmatpush1.bf16.msra.mxu0 %v575
  %916 = vmatprep.subr.bf16.mxu0 %v580
  %917 = vmatpush1.bf16.msra.mxu0 %v579
  %918 = vmatprep.subr.bf16.mxu0 %v584
  %919 = vmatpush1.bf16.msra.mxu0 %v583
  %920 = vmatprep.subr.bf16.mxu0 %v588
  %921 = vmatpush1.bf16.msra.mxu0 %v587
  %922 = vmatprep.subr.bf16.mxu0 %v592
  %923 = vmatpush1.bf16.msra.mxu0 %v591
  %924 = vmatprep.subr.bf16.mxu0 %v596
  %925 = vmatpush1.bf16.msra.mxu0 %v595
  %926 = vmatprep.subr.bf16.mxu0 %v600
  %927 = vmatpush1.bf16.msra.mxu0 %v599
  %928 = vmatprep.subr.bf16.mxu0 0
  %929 = vmatpush1.bf16.msra.mxu0 0
  %930 = vmatprep.subr.bf16.mxu0 0
  %931 = vmatpush1.bf16.msra.mxu0 0
  %932 = vmatprep.subr.bf16.mxu0 0
  %933 = vmatpush1.bf16.msra.mxu0 0
  %934 = vmatprep.subr.bf16.mxu0 0
  %935 = vmatpush1.bf16.msra.mxu0 0
  %936 = vmatprep.subr.bf16.mxu0 0
  %937 = vmatpush1.bf16.msra.mxu0 0
  %938 = vmatprep.subr.bf16.mxu0 0
  %939 = vmatpush1.bf16.msra.mxu0 0
  %940 = vmatprep.subr.bf16.mxu0 0
  %941 = vmatpush1.bf16.msra.mxu0 0
  %942 = vmatprep.subr.bf16.mxu0 0
  %943 = vmatpush1.bf16.msra.mxu0 0
  %944 = vmatprep.mubr.bf16.mxu0 0
  %945 = vmatmul.mubr.bf16.gmra.mrb[0].mxu0 %v870
  %v946 = vpop.f32.mrb[0].mxu0
  %v947 = vadd.f32 0.0, %v946
  %v948 = vpop.f32.mrb[0].mxu0
  %v949 = vadd.f32 0.0, %v948
  %v950 = vpop.f32.mrb[0].mxu0
  %v951 = vpop.f32.mrb[0].mxu0
  %952 = vdwg.mxu0
  %v953 = vadd.f32 %v866, %v906
  %v954 = vadd.f32 %v867, %v908
  %v955 = vadd.f32 %v868, %v947
  %v956 = vadd.f32 %v869, %v949
  %v957 = vmul.f32 %v953, 0.5
  %v958 = vtanh.pop %v957
  %v959 = vmul.f32 %v958, 0.5
  %v960 = vadd.f32 %v959, 0.5
  %v961 = vmul.f32 %v954, 0.5
  %v962 = vtanh.pop %v961
  %v963 = vmul.f32 %v962, 0.5
  %v964 = vadd.f32 %v963, 0.5
  %v965 = vtanh.pop %v955
  %v966 = vmul.f32 %v956, 0.5
  %v967 = vtanh.pop %v966
  %v968 = vmul.f32 %v967, 0.5
  %v969 = vadd.f32 %v968, 0.5
  %v970 = vmul.f32 %v964, %v862
  %v971 = vmul.f32 %v960, %v965
  %v972 = vadd.f32 %v970, %v971
  %v973 = vtanh.pop %v972
  %v974 = vmul.f32 %v969, %v973
  %s975 = sadd.s32 %s462, 2
  %v976 = vstv %s975
  %vm977 = vcmp.lt.s32.totalorder %v976, %v461
  %v978 = vsel %vm977, %v974, 0.0
  %s979 = scalar_lea.vmem %s4, 16
  %980 = vst [vmem:[%s979] sm:$0xff] %v978
  %v981 = vsel %vm977, %v974, %v861
  %v982 = vsel %vm977, %v972, %v862
  %s983 = smul.u32 3, 4
  %s984 = smul.addr %s983, 8
  %s985 = scalar_lea.vmem [#allocation2], %s984
  %v986 = vld [vmem:[%s985] sm:$0xff]
  %v987 = vld [vmem:[%s985 + $0x8] sm:$0xff]
  %v988 = vld [vmem:[%s985 + $0x10] sm:$0xff]
  %v989 = vld [vmem:[%s985 + $0x18] sm:$0xff]
  %v990 = vpack.c.bf16 %v981, %v981
  %991 = vmatprep.subr.bf16.mxu0 %v570
  %992 = vmatpush1.bf16.msra.mxu0 %v569
  %993 = vmatprep.subr.bf16.mxu0 %v574
  %994 = vmatpush1.bf16.msra.mxu0 %v573
  %995 = vmatprep.subr.bf16.mxu0 %v578
  %996 = vmatpush1.bf16.msra.mxu0 %v577
  %997 = vmatprep.subr.bf16.mxu0 %v582
  %998 = vmatpush1.bf16.msra.mxu0 %v581
  %999 = vmatprep.subr.bf16.mxu0 %v586
  %1000 = vmatpush1.bf16.msra.mxu0 %v585
  %1001 = vmatprep.subr.bf16.mxu0 %v590
  %1002 = vmatpush1.bf16.msra.mxu0 %v589
  %1003 = vmatprep.subr.bf16.mxu0 %v594
  %1004 = vmatpush1.bf16.msra.mxu0 %v593
  %1005 = vmatprep.subr.bf16.mxu0 %v598
  %1006 = vmatpush1.bf16.msra.mxu0 %v597
  %1007 = vmatprep.subr.bf16.mxu0 0
  %1008 = vmatpush1.bf16.msra.mxu0 0
  %1009 = vmatprep.subr.bf16.mxu0 0
  %1010 = vmatpush1.bf16.msra.mxu0 0
  %1011 = vmatprep.subr.bf16.mxu0 0
  %1012 = vmatpush1.bf16.msra.mxu0 0
  %1013 = vmatprep.subr.bf16.mxu0 0
  %1014 = vmatpush1.bf16.msra.mxu0 0
  %1015 = vmatprep.subr.bf16.mxu0 0
  %1016 = vmatpush1.bf16.msra.mxu0 0
  %1017 = vmatprep.subr.bf16.mxu0 0
  %1018 = vmatpush1.bf16.msra.mxu0 0
  %1019 = vmatprep.subr.bf16.mxu0 0
  %1020 = vmatpush1.bf16.msra.mxu0 0
  %1021 = vmatprep.subr.bf16.mxu0 0
  %1022 = vmatpush1.bf16.msra.mxu0 0
  %1023 = vmatprep.mubr.bf16.mxu0 0
  %1024 = vmatmul.mubr.bf16.gmra.mrb[0].mxu0 %v990
  %v1025 = vpop.f32.mrb[0].mxu0
  %v1026 = vadd.f32 0.0, %v1025
  %v1027 = vpop.f32.mrb[0].mxu0
  %v1028 = vadd.f32 0.0, %v1027
  %v1029 = vpop.f32.mrb[0].mxu0
  %v1030 = vpop.f32.mrb[0].mxu0
  %1031 = vdwg.mxu0
  %1032 = vmatprep.subr.bf16.mxu0 %v572
  %1033 = vmatpush1.bf16.msra.mxu0 %v571
  %1034 = vmatprep.subr.bf16.mxu0 %v576
  %1035 = vmatpush1.bf16.msra.mxu0 %v575
  %1036 = vmatprep.subr.bf16.mxu0 %v580
  %1037 = vmatpush1.bf16.msra.mxu0 %v579
  %1038 = vmatprep.subr.bf16.mxu0 %v584
  %1039 = vmatpush1.bf16.msra.mxu0 %v583
  %1040 = vmatprep.subr.bf16.mxu0 %v588
  %1041 = vmatpush1.bf16.msra.mxu0 %v587
  %1042 = vmatprep.subr.bf16.mxu0 %v592
  %1043 = vmatpush1.bf16.msra.mxu0 %v591
  %1044 = vmatprep.subr.bf16.mxu0 %v596
  %1045 = vmatpush1.bf16.msra.mxu0 %v595
  %1046 = vmatprep.subr.bf16.mxu0 %v600
  %1047 = vmatpush1.bf16.msra.mxu0 %v599
  %1048 = vmatprep.subr.bf16.mxu0 0
  %1049 = vmatpush1.bf16.msra.mxu0 0
  %1050 = vmatprep.subr.bf16.mxu0 0
  %1051 = vmatpush1.bf16.msra.mxu0 0
  %1052 = vmatprep.subr.bf16.mxu0 0
  %1053 = vmatpush1.bf16.msra.mxu0 0
  %1054 = vmatprep.subr.bf16.mxu0 0
  %1055 = vmatpush1.bf16.msra.mxu0 0
  %1056 = vmatprep.subr.bf16.mxu0 0
  %1057 = vmatpush1.bf16.msra.mxu0 0
  %1058 = vmatprep.subr.bf16.mxu0 0
  %1059 = vmatpush1.bf16.msra.mxu0 0
  %1060 = vmatprep.subr.bf16.mxu0 0
  %1061 = vmatpush1.bf16.msra.mxu0 0
  %1062 = vmatprep.subr.bf16.mxu0 0
  %1063 = vmatpush1.bf16.msra.mxu0 0
  %1064 = vmatprep.mubr.bf16.mxu0 0
  %1065 = vmatmul.mubr.bf16.gmra.mrb[0].mxu0 %v990
  %v1066 = vpop.f32.mrb[0].mxu0
  %v1067 = vadd.f32 0.0, %v1066
  %v1068 = vpop.f32.mrb[0].mxu0
  %v1069 = vadd.f32 0.0, %v1068
  %v1070 = vpop.f32.mrb[0].mxu0
  %v1071 = vpop.f32.mrb[0].mxu0
  %1072 = vdwg.mxu0
  %v1073 = vadd.f32 %v986, %v1026
  %v1074 = vadd.f32 %v987, %v1028
  %v1075 = vadd.f32 %v988, %v1067
  %v1076 = vadd.f32 %v989, %v1069
  %v1077 = vmul.f32 %v1073, 0.5
  %v1078 = vtanh.pop %v1077
  %v1079 = vmul.f32 %v1078, 0.5
  %v1080 = vadd.f32 %v1079, 0.5
  %v1081 = vmul.f32 %v1074, 0.5
  %v1082 = vtanh.pop %v1081
  %v1083 = vmul.f32 %v1082, 0.5
  %v1084 = vadd.f32 %v1083, 0.5
  %v1085 = vtanh.pop %v1075
  %v1086 = vmul.f32 %v1076, 0.5
  %v1087 = vtanh.pop %v1086
  %v1088 = vmul.f32 %v1087, 0.5
  %v1089 = vadd.f32 %v1088, 0.5
  %v1090 = vmul.f32 %v1084, %v982
  %v1091 = vmul.f32 %v1080, %v1085
  %v1092 = vadd.f32 %v1090, %v1091
  %v1093 = vtanh.pop %v1092
  %v1094 = vmul.f32 %v1089, %v1093
  %s1095 = sadd.s32 %s462, 3
  %v1096 = vstv %s1095
  %vm1097 = vcmp.lt.s32.totalorder %v1096, %v461
  %v1098 = vsel %vm1097, %v1094, 0.0
  %s1099 = scalar_lea.vmem %s4, 24
  %1100 = vst [vmem:[%s1099] sm:$0xff] %v1098
  %v1101 = vsel %vm1097, %v1094, %v981
  %v1102 = vsel %vm1097, %v1092, %v982
  %s1103 = smul.u32 4, 4
  %s1104 = smul.addr %s1103, 8
  %s1105 = scalar_lea.vmem [#allocation2], %s1104
  %v1106 = vld [vmem:[%s1105] sm:$0xff]
  %v1107 = vld [vmem:[%s1105 + $0x8] sm:$0xff]
  %v1108 = vld [vmem:[%s1105 + $0x10] sm:$0xff]
  %v1109 = vld [vmem:[%s1105 + $0x18] sm:$0xff]
  %v1110 = vpack.c.bf16 %v1101, %v1101
  %1111 = vmatprep.subr.bf16.mxu0 %v570
  %1112 = vmatpush1.bf16.msra.mxu0 %v569
  %1113 = vmatprep.subr.bf16.mxu0 %v574
  %1114 = vmatpush1.bf16.msra.mxu0 %v573
  %1115 = vmatprep.subr.bf16.mxu0 %v578
  %1116 = vmatpush1.bf16.msra.mxu0 %v577
  %1117 = vmatprep.subr.bf16.mxu0 %v582
  %1118 = vmatpush1.bf16.msra.mxu0 %v581
  %1119 = vmatprep.subr.bf16.mxu0 %v586
  %1120 = vmatpush1.bf16.msra.mxu0 %v585
  %1121 = vmatprep.subr.bf16.mxu0 %v590
  %1122 = vmatpush1.bf16.msra.mxu0 %v589
  %1123 = vmatprep.subr.bf16.mxu0 %v594
  %1124 = vmatpush1.bf16.msra.mxu0 %v593
  %1125 = vmatprep.subr.bf16.mxu0 %v598
  %1126 = vmatpush1.bf16.msra.mxu0 %v597
  %1127 = vmatprep.subr.bf16.mxu0 0
  %1128 = vmatpush1.bf16.msra.mxu0 0
  %1129 = vmatprep.subr.bf16.mxu0 0
  %1130 = vmatpush1.bf16.msra.mxu0 0
  %1131 = vmatprep.subr.bf16.mxu0 0
  %1132 = vmatpush1.bf16.msra.mxu0 0
  %1133 = vmatprep.subr.bf16.mxu0 0
  %1134 = vmatpush1.bf16.msra.mxu0 0
  %1135 = vmatprep.subr.bf16.mxu0 0
  %1136 = vmatpush1.bf16.msra.mxu0 0
  %1137 = vmatprep.subr.bf16.mxu0 0
  %1138 = vmatpush1.bf16.msra.mxu0 0
  %1139 = vmatprep.subr.bf16.mxu0 0
  %1140 = vmatpush1.bf16.msra.mxu0 0
  %1141 = vmatprep.subr.bf16.mxu0 0
  %1142 = vmatpush1.bf16.msra.mxu0 0
  %1143 = vmatprep.mubr.bf16.mxu0 0
  %1144 = vmatmul.mubr.bf16.gmra.mrb[0].mxu0 %v1110
  %v1145 = vpop.f32.mrb[0].mxu0
  %v1146 = vadd.f32 0.0, %v1145
  %v1147 = vpop.f32.mrb[0].mxu0
  %v1148 = vadd.f32 0.0, %v1147
  %v1149 = vpop.f32.mrb[0].mxu0
  %v1150 = vpop.f32.mrb[0].mxu0
  %1151 = vdwg.mxu0
  %1152 = vmatprep.subr.bf16.mxu0 %v572
  %1153 = vmatpush1.bf16.msra.mxu0 %v571
  %1154 = vmatprep.subr.bf16.mxu0 %v576
  %1155 = vmatpush1.bf16.msra.mxu0 %v575
  %1156 = vmatprep.subr.bf16.mxu0 %v580
  %1157 = vmatpush1.bf16.msra.mxu0 %v579
  %1158 = vmatprep.subr.bf16.mxu0 %v584
  %1159 = vmatpush1.bf16.msra.mxu0 %v583
  %1160 = vmatprep.subr.bf16.mxu0 %v588
  %1161 = vmatpush1.bf16.msra.mxu0 %v587
  %1162 = vmatprep.subr.bf16.mxu0 %v592
  %1163 = vmatpush1.bf16.msra.mxu0 %v591
  %1164 = vmatprep.subr.bf16.mxu0 %v596
  %1165 = vmatpush1.bf16.msra.mxu0 %v595
  %1166 = vmatprep.subr.bf16.mxu0 %v600
  %1167 = vmatpush1.bf16.msra.mxu0 %v599
  %1168 = vmatprep.subr.bf16.mxu0 0
  %1169 = vmatpush1.bf16.msra.mxu0 0
  %1170 = vmatprep.subr.bf16.mxu0 0
  %1171 = vmatpush1.bf16.msra.mxu0 0
  %1172 = vmatprep.subr.bf16.mxu0 0
  %1173 = vmatpush1.bf16.msra.mxu0 0
  %1174 = vmatprep.subr.bf16.mxu0 0
  %1175 = vmatpush1.bf16.msra.mxu0 0
  %1176 = vmatprep.subr.bf16.mxu0 0
  %1177 = vmatpush1.bf16.msra.mxu0 0
  %1178 = vmatprep.subr.bf16.mxu0 0
  %1179 = vmatpush1.bf16.msra.mxu0 0
  %1180 = vmatprep.subr.bf16.mxu0 0
  %1181 = vmatpush1.bf16.msra.mxu0 0
  %1182 = vmatprep.subr.bf16.mxu0 0
  %1183 = vmatpush1.bf16.msra.mxu0 0
  %1184 = vmatprep.mubr.bf16.mxu0 0
  %1185 = vmatmul.mubr.bf16.gmra.mrb[0].mxu0 %v1110
  %v1186 = vpop.f32.mrb[0].mxu0
  %v1187 = vadd.f32 0.0, %v1186
  %v1188 = vpop.f32.mrb[0].mxu0
  %v1189 = vadd.f32 0.0, %v1188
  %v1190 = vpop.f32.mrb[0].mxu0
  %v1191 = vpop.f32.mrb[0].mxu0
  %1192 = vdwg.mxu0
  %v1193 = vadd.f32 %v1106, %v1146
  %v1194 = vadd.f32 %v1107, %v1148
  %v1195 = vadd.f32 %v1108, %v1187
  %v1196 = vadd.f32 %v1109, %v1189
  %v1197 = vmul.f32 %v1193, 0.5
  %v1198 = vtanh.pop %v1197
  %v1199 = vmul.f32 %v1198, 0.5
  %v1200 = vadd.f32 %v1199, 0.5
  %v1201 = vmul.f32 %v1194, 0.5
  %v1202 = vtanh.pop %v1201
  %v1203 = vmul.f32 %v1202, 0.5
  %v1204 = vadd.f32 %v1203, 0.5
  %v1205 = vtanh.pop %v1195
  %v1206 = vmul.f32 %v1196, 0.5
  %v1207 = vtanh.pop %v1206
  %v1208 = vmul.f32 %v1207, 0.5
  %v1209 = vadd.f32 %v1208, 0.5
  %v1210 = vmul.f32 %v1204, %v1102
  %v1211 = vmul.f32 %v1200, %v1205
  %v1212 = vadd.f32 %v1210, %v1211
  %v1213 = vtanh.pop %v1212
  %v1214 = vmul.f32 %v1209, %v1213
  %s1215 = sadd.s32 %s462, 4
  %v1216 = vstv %s1215
  %vm1217 = vcmp.lt.s32.totalorder %v1216, %v461
  %v1218 = vsel %vm1217, %v1214, 0.0
  %s1219 = scalar_lea.vmem %s4, 32
  %1220 = vst [vmem:[%s1219] sm:$0xff] %v1218
  %v1221 = vsel %vm1217, %v1214, %v1101
  %v1222 = vsel %vm1217, %v1212, %v1102
  %s1223 = smul.u32 5, 4
  %s1224 = smul.addr %s1223, 8
  %s1225 = scalar_lea.vmem [#allocation2], %s1224
  %v1226 = vld [vmem:[%s1225] sm:$0xff]
  %v1227 = vld [vmem:[%s1225 + $0x8] sm:$0xff]
  %v1228 = vld [vmem:[%s1225 + $0x10] sm:$0xff]
  %v1229 = vld [vmem:[%s1225 + $0x18] sm:$0xff]
  %v1230 = vpack.c.bf16 %v1221, %v1221
  %1231 = vmatprep.subr.bf16.mxu0 %v570
  %1232 = vmatpush1.bf16.msra.mxu0 %v569
  %1233 = vmatprep.subr.bf16.mxu0 %v574
  %1234 = vmatpush1.bf16.msra.mxu0 %v573
  %1235 = vmatprep.subr.bf16.mxu0 %v578
  %1236 = vmatpush1.bf16.msra.mxu0 %v577
  %1237 = vmatprep.subr.bf16.mxu0 %v582
  %1238 = vmatpush1.bf16.msra.mxu0 %v581
  %1239 = vmatprep.subr.bf16.mxu0 %v586
  %1240 = vmatpush1.bf16.msra.mxu0 %v585
  %1241 = vmatprep.subr.bf16.mxu0 %v590
  %1242 = vmatpush1.bf16.msra.mxu0 %v589
  %1243 = vmatprep.subr.bf16.mxu0 %v594
  %1244 = vmatpush1.bf16.msra.mxu0 %v593
  %1245 = vmatprep.subr.bf16.mxu0 %v598
  %1246 = vmatpush1.bf16.msra.mxu0 %v597
  %1247 = vmatprep.subr.bf16.mxu0 0
  %1248 = vmatpush1.bf16.msra.mxu0 0
  %1249 = vmatprep.subr.bf16.mxu0 0
  %1250 = vmatpush1.bf16.msra.mxu0 0
  %1251 = vmatprep.subr.bf16.mxu0 0
  %1252 = vmatpush1.bf16.msra.mxu0 0
  %1253 = vmatprep.subr.bf16.mxu0 0
  %1254 = vmatpush1.bf16.msra.mxu0 0
  %1255 = vmatprep.subr.bf16.mxu0 0
  %1256 = vmatpush1.bf16.msra.mxu0 0
  %1257 = vmatprep.subr.bf16.mxu0 0
  %1258 = vmatpush1.bf16.msra.mxu0 0
  %1259 = vmatprep.subr.bf16.mxu0 0
  %1260 = vmatpush1.bf16.msra.mxu0 0
  %1261 = vmatprep.subr.bf16.mxu0 0
  %1262 = vmatpush1.bf16.msra.mxu0 0
  %1263 = vmatprep.mubr.bf16.mxu0 0
  %1264 = vmatmul.mubr.bf16.gmra.mrb[0].mxu0 %v1230
  %v1265 = vpop.f32.mrb[0].mxu0
  %v1266 = vadd.f32 0.0, %v1265
  %v1267 = vpop.f32.mrb[0].mxu0
  %v1268 = vadd.f32 0.0, %v1267
  %v1269 = vpop.f32.mrb[0].mxu0
  %v1270 = vpop.f32.mrb[0].mxu0
  %1271 = vdwg.mxu0
  %1272 = vmatprep.subr.bf16.mxu0 %v572
  %1273 = vmatpush1.bf16.msra.mxu0 %v571
  %1274 = vmatprep.subr.bf16.mxu0 %v576
  %1275 = vmatpush1.bf16.msra.mxu0 %v575
  %1276 = vmatprep.subr.bf16.mxu0 %v580
  %1277 = vmatpush1.bf16.msra.mxu0 %v579
  %1278 = vmatprep.subr.bf16.mxu0 %v584
  %1279 = vmatpush1.bf16.msra.mxu0 %v583
  %1280 = vmatprep.subr.bf16.mxu0 %v588
  %1281 = vmatpush1.bf16.msra.mxu0 %v587
  %1282 = vmatprep.subr.bf16.mxu0 %v592
  %1283 = vmatpush1.bf16.msra.mxu0 %v591
  %1284 = vmatprep.subr.bf16.mxu0 %v596
  %1285 = vmatpush1.bf16.msra.mxu0 %v595
  %1286 = vmatprep.subr.bf16.mxu0 %v600
  %1287 = vmatpush1.bf16.msra.mxu0 %v599
  %1288 = vmatprep.subr.bf16.mxu0 0
  %1289 = vmatpush1.bf16.msra.mxu0 0
  %1290 = vmatprep.subr.bf16.mxu0 0
  %1291 = vmatpush1.bf16.msra.mxu0 0
  %1292 = vmatprep.subr.bf16.mxu0 0
  %1293 = vmatpush1.bf16.msra.mxu0 0
  %1294 = vmatprep.subr.bf16.mxu0 0
  %1295 = vmatpush1.bf16.msra.mxu0 0
  %1296 = vmatprep.subr.bf16.mxu0 0
  %1297 = vmatpush1.bf16.msra.mxu0 0
  %1298 = vmatprep.subr.bf16.mxu0 0
  %1299 = vmatpush1.bf16.msra.mxu0 0
  %1300 = vmatprep.subr.bf16.mxu0 0
  %1301 = vmatpush1.bf16.msra.mxu0 0
  %1302 = vmatprep.subr.bf16.mxu0 0
  %1303 = vmatpush1.bf16.msra.mxu0 0
  %1304 = vmatprep.mubr.bf16.mxu0 0
  %1305 = vmatmul.mubr.bf16.gmra.mrb[0].mxu0 %v1230
  %v1306 = vpop.f32.mrb[0].mxu0
  %v1307 = vadd.f32 0.0, %v1306
  %v1308 = vpop.f32.mrb[0].mxu0
  %v1309 = vadd.f32 0.0, %v1308
  %v1310 = vpop.f32.mrb[0].mxu0
  %v1311 = vpop.f32.mrb[0].mxu0
  %1312 = vdwg.mxu0
  %v1313 = vadd.f32 %v1226, %v1266
  %v1314 = vadd.f32 %v1227, %v1268
  %v1315 = vadd.f32 %v1228, %v1307
  %v1316 = vadd.f32 %v1229, %v1309
  %v1317 = vmul.f32 %v1313, 0.5
  %v1318 = vtanh.pop %v1317
  %v1319 = vmul.f32 %v1318, 0.5
  %v1320 = vadd.f32 %v1319, 0.5
  %v1321 = vmul.f32 %v1314, 0.5
  %v1322 = vtanh.pop %v1321
  %v1323 = vmul.f32 %v1322, 0.5
  %v1324 = vadd.f32 %v1323, 0.5
  %v1325 = vtanh.pop %v1315
  %v1326 = vmul.f32 %v1316, 0.5
  %v1327 = vtanh.pop %v1326
  %v1328 = vmul.f32 %v1327, 0.5
  %v1329 = vadd.f32 %v1328, 0.5
  %v1330 = vmul.f32 %v1324, %v1222
  %v1331 = vmul.f32 %v1320, %v1325
  %v1332 = vadd.f32 %v1330, %v1331
  %v1333 = vtanh.pop %v1332
  %v1334 = vmul.f32 %v1329, %v1333
  %s1335 = sadd.s32 %s462, 5
  %v1336 = vstv %s1335
  %vm1337 = vcmp.lt.s32.totalorder %v1336, %v461
  %v1338 = vsel %vm1337, %v1334, 0.0
  %s1339 = scalar_lea.vmem %s4, 40
  %1340 = vst [vmem:[%s1339] sm:$0xff] %v1338
  %v1341 = vsel %vm1337, %v1334, %v1221
  %v1342 = vsel %vm1337, %v1332, %v1222
  %s1343 = smul.u32 6, 4
  %s1344 = smul.addr %s1343, 8
  %s1345 = scalar_lea.vmem [#allocation2], %s1344
  %v1346 = vld [vmem:[%s1345] sm:$0xff]
  %v1347 = vld [vmem:[%s1345 + $0x8] sm:$0xff]
  %v1348 = vld [vmem:[%s1345 + $0x10] sm:$0xff]
  %v1349 = vld [vmem:[%s1345 + $0x18] sm:$0xff]
  %v1350 = vpack.c.bf16 %v1341, %v1341
  %1351 = vmatprep.subr.bf16.mxu0 %v570
  %1352 = vmatpush1.bf16.msra.mxu0 %v569
  %1353 = vmatprep.subr.bf16.mxu0 %v574
  %1354 = vmatpush1.bf16.msra.mxu0 %v573
  %1355 = vmatprep.subr.bf16.mxu0 %v578
  %1356 = vmatpush1.bf16.msra.mxu0 %v577
  %1357 = vmatprep.subr.bf16.mxu0 %v582
  %1358 = vmatpush1.bf16.msra.mxu0 %v581
  %1359 = vmatprep.subr.bf16.mxu0 %v586
  %1360 = vmatpush1.bf16.msra.mxu0 %v585
  %1361 = vmatprep.subr.bf16.mxu0 %v590
  %1362 = vmatpush1.bf16.msra.mxu0 %v589
  %1363 = vmatprep.subr.bf16.mxu0 %v594
  %1364 = vmatpush1.bf16.msra.mxu0 %v593
  %1365 = vmatprep.subr.bf16.mxu0 %v598
  %1366 = vmatpush1.bf16.msra.mxu0 %v597
  %1367 = vmatprep.subr.bf16.mxu0 0
  %1368 = vmatpush1.bf16.msra.mxu0 0
  %1369 = vmatprep.subr.bf16.mxu0 0
  %1370 = vmatpush1.bf16.msra.mxu0 0
  %1371 = vmatprep.subr.bf16.mxu0 0
  %1372 = vmatpush1.bf16.msra.mxu0 0
  %1373 = vmatprep.subr.bf16.mxu0 0
  %1374 = vmatpush1.bf16.msra.mxu0 0
  %1375 = vmatprep.subr.bf16.mxu0 0
  %1376 = vmatpush1.bf16.msra.mxu0 0
  %1377 = vmatprep.subr.bf16.mxu0 0
  %1378 = vmatpush1.bf16.msra.mxu0 0
  %1379 = vmatprep.subr.bf16.mxu0 0
  %1380 = vmatpush1.bf16.msra.mxu0 0
  %1381 = vmatprep.subr.bf16.mxu0 0
  %1382 = vmatpush1.bf16.msra.mxu0 0
  %1383 = vmatprep.mubr.bf16.mxu0 0
  %1384 = vmatmul.mubr.bf16.gmra.mrb[0].mxu0 %v1350
  %v1385 = vpop.f32.mrb[0].mxu0
  %v1386 = vadd.f32 0.0, %v1385
  %v1387 = vpop.f32.mrb[0].mxu0
  %v1388 = vadd.f32 0.0, %v1387
  %v1389 = vpop.f32.mrb[0].mxu0
  %v1390 = vpop.f32.mrb[0].mxu0
  %1391 = vdwg.mxu0
  %1392 = vmatprep.subr.bf16.mxu0 %v572
  %1393 = vmatpush1.bf16.msra.mxu0 %v571
  %1394 = vmatprep.subr.bf16.mxu0 %v576
  %1395 = vmatpush1.bf16.msra.mxu0 %v575
  %1396 = vmatprep.subr.bf16.mxu0 %v580
  %1397 = vmatpush1.bf16.msra.mxu0 %v579
  %1398 = vmatprep.subr.bf16.mxu0 %v584
  %1399 = vmatpush1.bf16.msra.mxu0 %v583
  %1400 = vmatprep.subr.bf16.mxu0 %v588
  %1401 = vmatpush1.bf16.msra.mxu0 %v587
  %1402 = vmatprep.subr.bf16.mxu0 %v592
  %1403 = vmatpush1.bf16.msra.mxu0 %v591
  %1404 = vmatprep.subr.bf16.mxu0 %v596
  %1405 = vmatpush1.bf16.msra.mxu0 %v595
  %1406 = vmatprep.subr.bf16.mxu0 %v600
  %1407 = vmatpush1.bf16.msra.mxu0 %v599
  %1408 = vmatprep.subr.bf16.mxu0 0
  %1409 = vmatpush1.bf16.msra.mxu0 0
  %1410 = vmatprep.subr.bf16.mxu0 0
  %1411 = vmatpush1.bf16.msra.mxu0 0
  %1412 = vmatprep.subr.bf16.mxu0 0
  %1413 = vmatpush1.bf16.msra.mxu0 0
  %1414 = vmatprep.subr.bf16.mxu0 0
  %1415 = vmatpush1.bf16.msra.mxu0 0
  %1416 = vmatprep.subr.bf16.mxu0 0
  %1417 = vmatpush1.bf16.msra.mxu0 0
  %1418 = vmatprep.subr.bf16.mxu0 0
  %1419 = vmatpush1.bf16.msra.mxu0 0
  %1420 = vmatprep.subr.bf16.mxu0 0
  %1421 = vmatpush1.bf16.msra.mxu0 0
  %1422 = vmatprep.subr.bf16.mxu0 0
  %1423 = vmatpush1.bf16.msra.mxu0 0
  %1424 = vmatprep.mubr.bf16.mxu0 0
  %1425 = vmatmul.mubr.bf16.gmra.mrb[0].mxu0 %v1350
  %v1426 = vpop.f32.mrb[0].mxu0
  %v1427 = vadd.f32 0.0, %v1426
  %v1428 = vpop.f32.mrb[0].mxu0
  %v1429 = vadd.f32 0.0, %v1428
  %v1430 = vpop.f32.mrb[0].mxu0
  %v1431 = vpop.f32.mrb[0].mxu0
  %1432 = vdwg.mxu0
  %v1433 = vadd.f32 %v1346, %v1386
  %v1434 = vadd.f32 %v1347, %v1388
  %v1435 = vadd.f32 %v1348, %v1427
  %v1436 = vadd.f32 %v1349, %v1429
  %v1437 = vmul.f32 %v1433, 0.5
  %v1438 = vtanh.pop %v1437
  %v1439 = vmul.f32 %v1438, 0.5
  %v1440 = vadd.f32 %v1439, 0.5
  %v1441 = vmul.f32 %v1434, 0.5
  %v1442 = vtanh.pop %v1441
  %v1443 = vmul.f32 %v1442, 0.5
  %v1444 = vadd.f32 %v1443, 0.5
  %v1445 = vtanh.pop %v1435
  %v1446 = vmul.f32 %v1436, 0.5
  %v1447 = vtanh.pop %v1446
  %v1448 = vmul.f32 %v1447, 0.5
  %v1449 = vadd.f32 %v1448, 0.5
  %v1450 = vmul.f32 %v1444, %v1342
  %v1451 = vmul.f32 %v1440, %v1445
  %v1452 = vadd.f32 %v1450, %v1451
  %v1453 = vtanh.pop %v1452
  %v1454 = vmul.f32 %v1449, %v1453
  %s1455 = sadd.s32 %s462, 6
  %v1456 = vstv %s1455
  %vm1457 = vcmp.lt.s32.totalorder %v1456, %v461
  %v1458 = vsel %vm1457, %v1454, 0.0
  %s1459 = scalar_lea.vmem %s4, 48
  %1460 = vst [vmem:[%s1459] sm:$0xff] %v1458
  %v1461 = vsel %vm1457, %v1454, %v1341
  %v1462 = vsel %vm1457, %v1452, %v1342
  %s1463 = smul.u32 7, 4
  %s1464 = smul.addr %s1463, 8
  %s1465 = scalar_lea.vmem [#allocation2], %s1464
  %v1466 = vld [vmem:[%s1465] sm:$0xff]
  %v1467 = vld [vmem:[%s1465 + $0x8] sm:$0xff]
  %v1468 = vld [vmem:[%s1465 + $0x10] sm:$0xff]
  %v1469 = vld [vmem:[%s1465 + $0x18] sm:$0xff]
  %v1470 = vpack.c.bf16 %v1461, %v1461
  %1471 = vmatprep.subr.bf16.mxu0 %v570
  %1472 = vmatpush1.bf16.msra.mxu0 %v569
  %1473 = vmatprep.subr.bf16.mxu0 %v574
  %1474 = vmatpush1.bf16.msra.mxu0 %v573
  %1475 = vmatprep.subr.bf16.mxu0 %v578
  %1476 = vmatpush1.bf16.msra.mxu0 %v577
  %1477 = vmatprep.subr.bf16.mxu0 %v582
  %1478 = vmatpush1.bf16.msra.mxu0 %v581
  %1479 = vmatprep.subr.bf16.mxu0 %v586
  %1480 = vmatpush1.bf16.msra.mxu0 %v585
  %1481 = vmatprep.subr.bf16.mxu0 %v590
  %1482 = vmatpush1.bf16.msra.mxu0 %v589
  %1483 = vmatprep.subr.bf16.mxu0 %v594
  %1484 = vmatpush1.bf16.msra.mxu0 %v593
  %1485 = vmatprep.subr.bf16.mxu0 %v598
  %1486 = vmatpush1.bf16.msra.mxu0 %v597
  %1487 = vmatprep.subr.bf16.mxu0 0
  %1488 = vmatpush1.bf16.msra.mxu0 0
  %1489 = vmatprep.subr.bf16.mxu0 0
  %1490 = vmatpush1.bf16.msra.mxu0 0
  %1491 = vmatprep.subr.bf16.mxu0 0
  %1492 = vmatpush1.bf16.msra.mxu0 0
  %1493 = vmatprep.subr.bf16.mxu0 0
  %1494 = vmatpush1.bf16.msra.mxu0 0
  %1495 = vmatprep.subr.bf16.mxu0 0
  %1496 = vmatpush1.bf16.msra.mxu0 0
  %1497 = vmatprep.subr.bf16.mxu0 0
  %1498 = vmatpush1.bf16.msra.mxu0 0
  %1499 = vmatprep.subr.bf16.mxu0 0
  %1500 = vmatpush1.bf16.msra.mxu0 0
  %1501 = vmatprep.subr.bf16.mxu0 0
  %1502 = vmatpush1.bf16.msra.mxu0 0
  %1503 = vmatprep.mubr.bf16.mxu0 0
  %1504 = vmatmul.mubr.bf16.gmra.mrb[0].mxu0 %v1470
  %v1505 = vpop.f32.mrb[0].mxu0
  %v1506 = vadd.f32 0.0, %v1505
  %v1507 = vpop.f32.mrb[0].mxu0
  %v1508 = vadd.f32 0.0, %v1507
  %v1509 = vpop.f32.mrb[0].mxu0
  %v1510 = vpop.f32.mrb[0].mxu0
  %1511 = vdwg.mxu0
  %1512 = vmatprep.subr.bf16.mxu0 %v572
  %1513 = vmatpush1.bf16.msra.mxu0 %v571
  %1514 = vmatprep.subr.bf16.mxu0 %v576
  %1515 = vmatpush1.bf16.msra.mxu0 %v575
  %1516 = vmatprep.subr.bf16.mxu0 %v580
  %1517 = vmatpush1.bf16.msra.mxu0 %v579
  %1518 = vmatprep.subr.bf16.mxu0 %v584
  %1519 = vmatpush1.bf16.msra.mxu0 %v583
  %1520 = vmatprep.subr.bf16.mxu0 %v588
  %1521 = vmatpush1.bf16.msra.mxu0 %v587
  %1522 = vmatprep.subr.bf16.mxu0 %v592
  %1523 = vmatpush1.bf16.msra.mxu0 %v591
  %1524 = vmatprep.subr.bf16.mxu0 %v596
  %1525 = vmatpush1.bf16.msra.mxu0 %v595
  %1526 = vmatprep.subr.bf16.mxu0 %v600
  %1527 = vmatpush1.bf16.msra.mxu0 %v599
  %1528 = vmatprep.subr.bf16.mxu0 0
  %1529 = vmatpush1.bf16.msra.mxu0 0
  %1530 = vmatprep.subr.bf16.mxu0 0
  %1531 = vmatpush1.bf16.msra.mxu0 0
  %1532 = vmatprep.subr.bf16.mxu0 0
  %1533 = vmatpush1.bf16.msra.mxu0 0
  %1534 = vmatprep.subr.bf16.mxu0 0
  %1535 = vmatpush1.bf16.msra.mxu0 0
  %1536 = vmatprep.subr.bf16.mxu0 0
  %1537 = vmatpush1.bf16.msra.mxu0 0
  %1538 = vmatprep.subr.bf16.mxu0 0
  %1539 = vmatpush1.bf16.msra.mxu0 0
  %1540 = vmatprep.subr.bf16.mxu0 0
  %1541 = vmatpush1.bf16.msra.mxu0 0
  %1542 = vmatprep.subr.bf16.mxu0 0
  %1543 = vmatpush1.bf16.msra.mxu0 0
  %1544 = vmatprep.mubr.bf16.mxu0 0
  %1545 = vmatmul.mubr.bf16.gmra.mrb[0].mxu0 %v1470
  %v1546 = vpop.f32.mrb[0].mxu0
  %v1547 = vadd.f32 0.0, %v1546
  %v1548 = vpop.f32.mrb[0].mxu0
  %v1549 = vadd.f32 0.0, %v1548
  %v1550 = vpop.f32.mrb[0].mxu0
  %v1551 = vpop.f32.mrb[0].mxu0
  %1552 = vdwg.mxu0
  %v1553 = vadd.f32 %v1466, %v1506
  %v1554 = vadd.f32 %v1467, %v1508
  %v1555 = vadd.f32 %v1468, %v1547
  %v1556 = vadd.f32 %v1469, %v1549
  %v1557 = vmul.f32 %v1553, 0.5
  %v1558 = vtanh.pop %v1557
  %v1559 = vmul.f32 %v1558, 0.5
  %v1560 = vadd.f32 %v1559, 0.5
  %v1561 = vmul.f32 %v1554, 0.5
  %v1562 = vtanh.pop %v1561
  %v1563 = vmul.f32 %v1562, 0.5
  %v1564 = vadd.f32 %v1563, 0.5
  %v1565 = vtanh.pop %v1555
  %v1566 = vmul.f32 %v1556, 0.5
  %v1567 = vtanh.pop %v1566
  %v1568 = vmul.f32 %v1567, 0.5
  %v1569 = vadd.f32 %v1568, 0.5
  %v1570 = vmul.f32 %v1564, %v1462
  %v1571 = vmul.f32 %v1560, %v1565
  %v1572 = vadd.f32 %v1570, %v1571
  %v1573 = vtanh.pop %v1572
  %v1574 = vmul.f32 %v1569, %v1573
  %s1575 = sadd.s32 %s462, 7
  %v1576 = vstv %s1575
  %vm1577 = vcmp.lt.s32.totalorder %v1576, %v461
  %v1578 = vsel %vm1577, %v1574, 0.0
  %s1579 = scalar_lea.vmem %s4, 56
  %1580 = vst [vmem:[%s1579] sm:$0xff] %v1578
  %v1581 = vsel %vm1577, %v1574, %v1461
  %v1582 = vsel %vm1577, %v1572, %v1462
  %1583 = vst [vmem:[%s5] sm:$0xff] %v1581
  %1584 = vst [vmem:[%s6] sm:$0xff] %v1582
  // Predicated region
  $region22: #{rnn_encoder_forward.1} parent=0 // pred_check
    _
  $region23: #{rnn_encoder_forward.1} parent=0 // pred_check_branch
    %1586 = sbr.rel (0) target = $region25
  $region24: #{rnn_encoder_forward.1} parent=0 // pred_region
    _
  $region25: #{rnn_encoder_forward.1} parent=0 // pred_fallthru
    _
  // Predicated region
  $region26: #{rnn_encoder_forward.1} parent=0 // pred_check
    _
  $region27: #{rnn_encoder_forward.1} parent=0 // pred_check_branch
    %1588 = sbr.rel (0) target = $region29
  $region28: #{rnn_encoder_forward.1} parent=0 // pred_region
    _
  $region29: #{rnn_encoder_forward.1} parent=0 // pred_fallthru
    _
  // Predicated region
  $region30: #{rnn_encoder_forward.1} parent=0 // pred_check
    _
  $region31: #{rnn_encoder_forward.1} parent=0 // pred_check_branch
    %1590 = sbr.rel (0) target = $region33
  $region32: #{rnn_encoder_forward.1} parent=0 // pred_region
    _
  $region33: #{rnn_encoder_forward.1} parent=0 // pred_fallthru
    _
  // Predicated region
  $region34: #{rnn_encoder_forward.1} parent=0 // pred_check
    _
  $region35: #{rnn_encoder_forward.1} parent=0 // pred_check_branch
    %1592 = sbr.rel (0) target = $region37
  $region36: #{rnn_encoder_forward.1} parent=0 // pred_region
    _
  $region37: #{rnn_encoder_forward.1} parent=0 // pred_fallthru
    _
  // Predicated region
  $region38: #{rnn_encoder_forward.1} parent=0 // pred_check
    _
  $region39: #{rnn_encoder_forward.1} parent=0 // pred_check_branch
    %1594 = sbr.rel (0) target = $region41
  $region40: #{rnn_encoder_forward.1} parent=0 // pred_region
    _
  $region41: #{rnn_encoder_forward.1} parent=0 // pred_fallthru
    _
  // Predicated region
  $region42: #{rnn_encoder_forward.1} parent=0 // pred_check
    _
  $region43: #{rnn_encoder_forward.1} parent=0 // pred_check_branch
    %1596 = sbr.rel (0) target = $region45
  $region44: #{rnn_encoder_forward.1} parent=0 // pred_region
    _
  $region45: #{rnn_encoder_forward.1} parent=0 // pred_fallthru
    _

</llo_original>
